<compile_context>
chip_gen: v7x
topology: tpu7x:2x2x1
jax: 0.10.0
libtpu: 0.0.40
codegen_flags: <defaults>
</compile_context>

<pallas_src>
import functools
import math

import jax
import jax.numpy as jnp
from jax.experimental import pallas as pl
from jax.experimental.pallas import tpu as pltpu

# ---------------- MMFN_config ----------------
D_MODEL = 32
K_DIM = 32
V_DIM = 32
NUM_HEADS = 4
HEAD_DIM = K_DIM // NUM_HEADS
LN_EPS = 1e-5


def _layernorm(x, gamma, beta):
    mu = jnp.mean(x, axis=-1, keepdims=True)
    var = jnp.mean((x - mu) ** 2, axis=-1, keepdims=True)
    return (x - mu) * jax.lax.rsqrt(var + LN_EPS) * gamma + beta


def _kernel(a_ref, b_ref, w_in_ref, w_post_ref, bproj_ref, bpost_ref,
            xo_ref, attnw_ref, *, compute_dtype):
    cd = compute_dtype
    Mq, _ = a_ref.shape
    TB, Sq, Sk = attnw_ref.shape
    E = K_DIM
    H, hd = NUM_HEADS, HEAD_DIM

    A2 = a_ref[...]                       # (Mq, Dm)  rows = (batch, query) flattened
    B2 = b_ref[...]                       # (Mk, Dm)

    Wa = w_in_ref[0]                      # (Dm, 2E)  [W_q | scale * W_q @ in_w_q.T]
    Wb = w_in_ref[1]                      # (Dm, 2E)  [W_k @ in_w_k.T | W_v @ in_w_v.T]
    owT = w_post_ref[0]                   # (E, E)    out_proj weight, pre-transposed
    fw1T = w_post_ref[1]                  # (E, E)    FFN layer 1, pre-transposed
    fw2T = w_post_ref[2]                  # (E, E)    FFN layer 2, pre-transposed

    bias_a = bproj_ref[0:1]               # (1, 2E)   [0 | scale * in_b_q]
    bias_b = bproj_ref[1:2]               # (1, 2E)   [in_b_k | in_b_v]
    bpost = bpost_ref[...]                # (8, E)
    ob, g1, be1 = bpost[0:1], bpost[1:2], bpost[2:3]
    fb1, fb2 = bpost[3:4], bpost[4:5]
    g2, be2 = bpost[5:6], bpost[6:7]

    # ---- fused wide projections: two matmuls with N = 2E = 64 lanes ----------
    ap = jnp.dot(A2, Wa, preferred_element_type=jnp.float32) + bias_a   # (Mq, 2E)
    bp = jnp.dot(B2, Wb, preferred_element_type=jnp.float32) + bias_b   # (Mk, 2E)

    Q = ap[:, :E]                                   # module-level Q (for residual)
    qp3 = ap[:, E:].reshape(TB, Sq, E)              # scaled q projection
    kp3 = bp[:, :E].reshape(TB, Sk, E)
    vp3 = bp[:, E:].reshape(TB, Sk, E)

    # ---- all heads batched along the leading axis (rank-3 ops only) ----------
    q_stack = jnp.concatenate(
        [qp3[:, :, h * hd:(h + 1) * hd] for h in range(H)], axis=0)   # (H*TB, Sq, hd)
    k_stack = jnp.concatenate(
        [kp3[:, :, h * hd:(h + 1) * hd] for h in range(H)], axis=0)   # (H*TB, Sk, hd)
    v_stack = jnp.concatenate(
        [vp3[:, :, h * hd:(h + 1) * hd] for h in range(H)], axis=0)   # (H*TB, Sk, hd)

    s = jnp.einsum("bqd,bkd->bqk", q_stack.astype(cd), k_stack.astype(cd),
                   preferred_element_type=jnp.float32)                # (H*TB, Sq, Sk)
    m = jnp.max(s, axis=-1, keepdims=True)
    e = jnp.exp(s - m)
    l = jnp.sum(e, axis=-1, keepdims=True)
    p = e * pl.reciprocal(l, approx=True)                             # (H*TB, Sq, Sk)

    ctx = jnp.einsum("bqk,bkd->bqd", p.astype(cd), v_stack.astype(cd),
                     preferred_element_type=jnp.float32)              # (H*TB, Sq, hd)

    # Head-averaged attention weights (cheap leading-axis slices).
    w_mean = p[0:TB]
    for h in range(1, H):
        w_mean = w_mean + p[h * TB:(h + 1) * TB]
    w_mean = w_mean * (1.0 / H)                                       # (TB, Sq, Sk)

    # Re-pack per-head contexts into lanes, then ONE out-projection matmul.
    ctx_cat = jnp.concatenate(
        [ctx[h * TB:(h + 1) * TB] for h in range(H)], axis=-1)        # (TB, Sq, E)
    attn_out = jnp.dot(ctx_cat.reshape(Mq, E).astype(cd), owT,
                       preferred_element_type=jnp.float32) + ob       # (Mq, E)

    # ---- post-attention transformer block (elementwise math stays f32) -------
    x1 = _layernorm(Q + attn_out, g1, be1)
    ff = jnp.maximum(
        jnp.dot(x1.astype(cd), fw1T, preferred_element_type=jnp.float32) + fb1, 0.0)
    ff = jnp.dot(ff.astype(cd), fw2T, preferred_element_type=jnp.float32) + fb2
    x2 = _layernorm(x1 + ff, g2, be2)

    # Lane-dense (64-wide) combined output slab: [x | attn_output].
    xo_ref[:, :E] = x2
    xo_ref[:, E:] = attn_out
    attnw_ref[...] = w_mean


def ct_co_attention_transformer(A, B, params, batch_tile=None,
                                compute_dtype=jnp.float32):
    """Returns (x, attn_output, attn_output_weights).

    compute_dtype: matmul-operand dtype.  jnp.bfloat16 is recommended on
    v6e/v7x (accumulation stays f32 either way); default f32 keeps the
    comparison against the f32 reference bit-robust.
    """
    Bsz, Sq, Dm = A.shape
    _, Sk, _ = B.shape
    E = K_DIM

    # Batch tile: keep the grid length >= 2 so both v7x TensorCores get work;
    # on v5e/v6e the extra grid step only costs ~0.35 us.
    if batch_tile is not None:
        TB = batch_tile
    elif Bsz >= 2 and Bsz % 2 == 0:
        TB = Bsz // 2
    else:
        TB = Bsz
    assert Bsz % TB == 0
    # Note: for realistic Sq, a second "parallel" grid axis tiling the query
    # dimension would keep the (TB, Sq, Sk) score block bounded; unnecessary
    # at these sizes.

    scale = 1.0 / math.sqrt(HEAD_DIM)

    # ---- host-side weight prep (pure layout plumbing, zero kernel cost) ------
    Wa = jnp.concatenate(
        [params["W_q"], scale * (params["W_q"] @ params["in_w_q"].T)], axis=1)
    Wb = jnp.concatenate(
        [params["W_k"] @ params["in_w_k"].T,
         params["W_v"] @ params["in_w_v"].T], axis=1)
    w_in = jnp.stack([Wa, Wb]).astype(compute_dtype)                  # (2, Dm, 2E)
    w_post = jnp.stack([params["out_w"].T, params["ff_w1"].T,
                        params["ff_w2"].T]).astype(compute_dtype)     # (3, E, E)

    zero = jnp.zeros((E,), jnp.float32)
    bias_proj = jnp.stack([
        jnp.concatenate([zero, scale * params["in_b_q"].reshape(E)]),
        jnp.concatenate([params["in_b_k"].reshape(E),
                         params["in_b_v"].reshape(E)]),
    ]).astype(jnp.float32)                                            # (2, 2E)
    bias_post = jnp.stack([
        params["out_b"].reshape(E),
        params["ln1_g"].reshape(E), params["ln1_b"].reshape(E),
        params["ff_b1"].reshape(E), params["ff_b2"].reshape(E),
        params["ln2_g"].reshape(E), params["ln2_b"].reshape(E),
        zero,                                    # pad to 8 rows (sublane-aligned)
    ]).astype(jnp.float32)                                            # (8, E)

    # Inputs flattened host-side (free XLA reshape of contiguous data).
    A2 = A.reshape(Bsz * Sq, Dm).astype(compute_dtype)
    B2 = B.reshape(Bsz * Sk, Dm).astype(compute_dtype)

    grid = (Bsz // TB,)
    in_specs = [
        pl.BlockSpec((TB * Sq, Dm), lambda b: (b, 0)),
        pl.BlockSpec((TB * Sk, Dm), lambda b: (b, 0)),
        pl.BlockSpec(w_in.shape, lambda b: (0, 0, 0)),
        pl.BlockSpec(w_post.shape, lambda b: (0, 0, 0)),
        pl.BlockSpec(bias_proj.shape, lambda b: (0, 0)),
        pl.BlockSpec(bias_post.shape, lambda b: (0, 0)),
    ]
    out_shape = (
        jax.ShapeDtypeStruct((Bsz * Sq, 2 * E), jnp.float32),  # [x | attn_output]
        jax.ShapeDtypeStruct((Bsz, Sq, Sk), jnp.float32),      # head-avg attn weights
    )
    out_specs = (
        pl.BlockSpec((TB * Sq, 2 * E), lambda b: (b, 0)),
        pl.BlockSpec((TB, Sq, Sk), lambda b: (b, 0, 0)),
    )
    xo, attn_w = pl.pallas_call(
        functools.partial(_kernel, compute_dtype=compute_dtype),
        out_shape=out_shape,
        grid=grid,
        in_specs=in_specs,
        out_specs=out_specs,
        compiler_params=pltpu.CompilerParams(
            dimension_semantics=("parallel",),
            # Explicit scoped-VMEM budget: under v7x's 64 MiB physical VMEM,
            # above the 16/32 MiB scoped defaults on v5e/v6e.
            vmem_limit_bytes=48 * 1024 * 1024,
        ),
    )(A2, B2, w_in, w_post, bias_proj, bias_post)

    x = xo[:, :E].reshape(Bsz, Sq, E)
    attn_out = xo[:, E:].reshape(Bsz, Sq, E)
    return x, attn_out, attn_w


# ---------------- pure-JAX reference (for correctness check) ----------------
def _reference(A, B, p):
    Q = A @ p["W_q"]
    K = B @ p["W_k"]
    V = B @ p["W_v"]
    qp = Q @ p["in_w_q"].T + p["in_b_q"]
    kp = K @ p["in_w_k"].T + p["in_b_k"]
    vp = V @ p["in_w_v"].T + p["in_b_v"]
    Bsz, Sq, E = qp.shape
    Sk = kp.shape[1]
    qh = qp.reshape(Bsz, Sq, NUM_HEADS, HEAD_DIM).transpose(0, 2, 1, 3)
    kh = kp.reshape(Bsz, Sk, NUM_HEADS, HEAD_DIM).transpose(0, 2, 1, 3)
    vh = vp.reshape(Bsz, Sk, NUM_HEADS, HEAD_DIM).transpose(0, 2, 1, 3)
    s = jnp.einsum("bhqd,bhkd->bhqk", qh, kh) / math.sqrt(HEAD_DIM)
    w = jax.nn.softmax(s, axis=-1)
    ctx = jnp.einsum("bhqk,bhkd->bhqd", w, vh).transpose(0, 2, 1, 3).reshape(Bsz, Sq, E)
    attn_out = ctx @ p["out_w"].T + p["out_b"]
    attn_w = w.mean(axis=1)

    def ln(x, g, b):
        mu = x.mean(-1, keepdims=True)
        var = ((x - mu) ** 2).mean(-1, keepdims=True)
        return (x - mu) / jnp.sqrt(var + LN_EPS) * g + b

    x1 = ln(Q + attn_out, p["ln1_g"], p["ln1_b"])
    ff = jnp.maximum(x1 @ p["ff_w1"].T + p["ff_b1"], 0.0) @ p["ff_w2"].T + p["ff_b2"]
    x2 = ln(x1 + ff, p["ln2_g"], p["ln2_b"])
    return x2, attn_out, attn_w


def make_params(key):
    ks = jax.random.split(key, 12)
    E = K_DIM
    n = lambda k, shape, s=0.1: (s * jax.random.normal(k, shape)).astype(jnp.float32)
    return {
        "W_q": n(ks[0], (D_MODEL, K_DIM)),
        "W_k": n(ks[1], (D_MODEL, K_DIM)),
        "W_v": n(ks[2], (D_MODEL, V_DIM)),
        "in_w_q": n(ks[3], (E, E)),
        "in_w_k": n(ks[4], (E, E)),
        "in_w_v": n(ks[5], (E, E)),
        "in_b_q": n(ks[6], (1, E)),
        "in_b_k": n(ks[7], (1, E)),
        "in_b_v": n(ks[8], (1, E)),
        "out_w": n(ks[9], (E, E)),
        "out_b": n(ks[10], (1, E)),
        "ln1_g": jnp.ones((1, E), jnp.float32),
        "ln1_b": jnp.zeros((1, E), jnp.float32),
        "ff_w1": n(ks[11], (E, E)),
        "ff_b1": jnp.zeros((1, E), jnp.float32),
        "ff_w2": n(jax.random.fold_in(key, 99), (E, E)),
        "ff_b2": jnp.zeros((1, E), jnp.float32),
        "ln2_g": jnp.ones((1, E), jnp.float32),
        "ln2_b": jnp.zeros((1, E), jnp.float32),
    }


if __name__ == "__main__":
    key = jax.random.PRNGKey(0)
    ka, kb, kp = jax.random.split(key, 3)

    batch, seq_q, seq_k = 2, 8, 8
    A = jax.random.normal(ka, (batch, seq_q, D_MODEL), dtype=jnp.float32)
    B = jax.random.normal(kb, (batch, seq_k, D_MODEL), dtype=jnp.float32)
    params = make_params(kp)

    x, attn_out, attn_w = ct_co_attention_transformer(A, B, params)
    jax.block_until_ready((x, attn_out, attn_w))

    xr, aor, awr = _reference(A, B, params)
    assert jnp.allclose(x, xr, atol=1e-2, rtol=1e-2)
    assert jnp.allclose(attn_out, aor, atol=1e-2, rtol=1e-2)
    assert jnp.allclose(attn_w, awr, atol=1e-2, rtol=1e-2)

    print("KERNEL_OK")
</pallas_src>

<mosaic_0001>
module attributes {stable_mosaic.version = 11 : i64} {
  func.func @_kernel(%arg0: i32, %arg1: memref<8x32xf32, #tpu.memory_space<vmem>>, %arg2: memref<8x32xf32, #tpu.memory_space<vmem>>, %arg3: memref<2x32x64xf32, #tpu.memory_space<vmem>>, %arg4: memref<3x32x32xf32, #tpu.memory_space<vmem>>, %arg5: memref<2x64xf32, #tpu.memory_space<vmem>>, %arg6: memref<8x32xf32, #tpu.memory_space<vmem>>, %arg7: memref<8x64xf32, #tpu.memory_space<vmem>>, %arg8: memref<1x8x8xf32, #tpu.memory_space<vmem>>) attributes {dimension_semantics = [#tpu.dimension_semantics<parallel>], iteration_bounds = array<i64: 2>, scalar_prefetch = 0 : i64, scratch_operands = 0 : i64, tpu.core_type = #tpu.core_type<tc>, window_params = [{transform_indices = @transform_0, window_bounds = array<i64: 8, 32>}, {transform_indices = @transform_1, window_bounds = array<i64: 8, 32>}, {pipeline_mode = #tpu.pipeline_mode<synchronous>, transform_indices = @transform_2, window_bounds = array<i64: 2, 32, 64>}, {pipeline_mode = #tpu.pipeline_mode<synchronous>, transform_indices = @transform_3, window_bounds = array<i64: 3, 32, 32>}, {pipeline_mode = #tpu.pipeline_mode<synchronous>, transform_indices = @transform_4, window_bounds = array<i64: 2, 64>}, {pipeline_mode = #tpu.pipeline_mode<synchronous>, transform_indices = @transform_5, window_bounds = array<i64: 8, 32>}, {transform_indices = @transform_6, window_bounds = array<i64: 8, 64>}, {transform_indices = @transform_7, window_bounds = array<i64: 1, 8, 8>}]} {
    %c0 = arith.constant 0 : index
    %c0_0 = arith.constant 0 : index
    %0 = vector.load %arg1[%c0, %c0_0] : memref<8x32xf32, #tpu.memory_space<vmem>>, vector<8x32xf32>
    %c0_1 = arith.constant 0 : index
    %c0_2 = arith.constant 0 : index
    %1 = vector.load %arg2[%c0_1, %c0_2] : memref<8x32xf32, #tpu.memory_space<vmem>>, vector<8x32xf32>
    %c0_3 = arith.constant 0 : index
    %c0_4 = arith.constant 0 : index
    %c0_5 = arith.constant 0 : index
    %2 = vector.load %arg3[%c0_3, %c0_4, %c0_5] : memref<2x32x64xf32, #tpu.memory_space<vmem>>, vector<1x32x64xf32>
    %3 = vector.shape_cast %2 : vector<1x32x64xf32> to vector<32x64xf32>
    %c1 = arith.constant 1 : index
    %c0_6 = arith.constant 0 : index
    %c0_7 = arith.constant 0 : index
    %4 = vector.load %arg3[%c1, %c0_6, %c0_7] : memref<2x32x64xf32, #tpu.memory_space<vmem>>, vector<1x32x64xf32>
    %5 = vector.shape_cast %4 : vector<1x32x64xf32> to vector<32x64xf32>
    %c0_8 = arith.constant 0 : index
    %c0_9 = arith.constant 0 : index
    %c0_10 = arith.constant 0 : index
    %6 = vector.load %arg4[%c0_8, %c0_9, %c0_10] : memref<3x32x32xf32, #tpu.memory_space<vmem>>, vector<1x32x32xf32>
    %7 = vector.shape_cast %6 : vector<1x32x32xf32> to vector<32x32xf32>
    %c1_11 = arith.constant 1 : index
    %c0_12 = arith.constant 0 : index
    %c0_13 = arith.constant 0 : index
    %8 = vector.load %arg4[%c1_11, %c0_12, %c0_13] : memref<3x32x32xf32, #tpu.memory_space<vmem>>, vector<1x32x32xf32>
    %9 = vector.shape_cast %8 : vector<1x32x32xf32> to vector<32x32xf32>
    %c2 = arith.constant 2 : index
    %c0_14 = arith.constant 0 : index
    %c0_15 = arith.constant 0 : index
    %10 = vector.load %arg4[%c2, %c0_14, %c0_15] : memref<3x32x32xf32, #tpu.memory_space<vmem>>, vector<1x32x32xf32>
    %11 = vector.shape_cast %10 : vector<1x32x32xf32> to vector<32x32xf32>
    %c0_16 = arith.constant 0 : index
    %c0_17 = arith.constant 0 : index
    %12 = vector.load %arg5[%c0_16, %c0_17] : memref<2x64xf32, #tpu.memory_space<vmem>>, vector<1x64xf32>
    %c1_18 = arith.constant 1 : index
    %c0_19 = arith.constant 0 : index
    %13 = vector.load %arg5[%c1_18, %c0_19] : memref<2x64xf32, #tpu.memory_space<vmem>>, vector<1x64xf32>
    %c0_20 = arith.constant 0 : index
    %c0_21 = arith.constant 0 : index
    %14 = vector.load %arg6[%c0_20, %c0_21] : memref<8x32xf32, #tpu.memory_space<vmem>>, vector<8x32xf32>
    %15 = vector.extract_strided_slice %14 {offsets = [0, 0], sizes = [1, 32], strides = [1, 1]} : vector<8x32xf32> to vector<1x32xf32>
    %16 = vector.extract_strided_slice %14 {offsets = [1, 0], sizes = [1, 32], strides = [1, 1]} : vector<8x32xf32> to vector<1x32xf32>
    %17 = vector.extract_strided_slice %14 {offsets = [2, 0], sizes = [1, 32], strides = [1, 1]} : vector<8x32xf32> to vector<1x32xf32>
    %18 = vector.extract_strided_slice %14 {offsets = [3, 0], sizes = [1, 32], strides = [1, 1]} : vector<8x32xf32> to vector<1x32xf32>
    %19 = vector.extract_strided_slice %14 {offsets = [4, 0], sizes = [1, 32], strides = [1, 1]} : vector<8x32xf32> to vector<1x32xf32>
    %20 = vector.extract_strided_slice %14 {offsets = [5, 0], sizes = [1, 32], strides = [1, 1]} : vector<8x32xf32> to vector<1x32xf32>
    %21 = vector.extract_strided_slice %14 {offsets = [6, 0], sizes = [1, 32], strides = [1, 1]} : vector<8x32xf32> to vector<1x32xf32>
    %cst = arith.constant dense<0.000000e+00> : vector<8x64xf32>
    %22 = tpu.matmul %0, %3, %cst {dimension_numbers = #tpu.dot_dimension_numbers<[1], [0], [0], [1], [0, 0, 1, 1], [], []>} : vector<8x32xf32>, vector<32x64xf32>, vector<8x64xf32> -> vector<8x64xf32>
    %23 = vector.broadcast %12 : vector<1x64xf32> to vector<8x64xf32>
    %24 = arith.addf %22, %23 : vector<8x64xf32>
    %cst_22 = arith.constant dense<0.000000e+00> : vector<8x64xf32>
    %25 = tpu.matmul %1, %5, %cst_22 {dimension_numbers = #tpu.dot_dimension_numbers<[1], [0], [0], [1], [0, 0, 1, 1], [], []>} : vector<8x32xf32>, vector<32x64xf32>, vector<8x64xf32> -> vector<8x64xf32>
    %26 = vector.broadcast %13 : vector<1x64xf32> to vector<8x64xf32>
    %27 = arith.addf %25, %26 : vector<8x64xf32>
    %28 = vector.extract_strided_slice %24 {offsets = [0, 0], sizes = [8, 32], strides = [1, 1]} : vector<8x64xf32> to vector<8x32xf32>
    %29 = vector.extract_strided_slice %24 {offsets = [0, 32], sizes = [8, 32], strides = [1, 1]} : vector<8x64xf32> to vector<8x32xf32>
    %30 = vector.shape_cast %29 : vector<8x32xf32> to vector<1x8x32xf32>
    %31 = vector.extract_strided_slice %27 {offsets = [0, 0], sizes = [8, 32], strides = [1, 1]} : vector<8x64xf32> to vector<8x32xf32>
    %32 = vector.shape_cast %31 : vector<8x32xf32> to vector<1x8x32xf32>
    %33 = vector.extract_strided_slice %27 {offsets = [0, 32], sizes = [8, 32], strides = [1, 1]} : vector<8x64xf32> to vector<8x32xf32>
    %34 = vector.shape_cast %33 : vector<8x32xf32> to vector<1x8x32xf32>
    %35 = vector.extract_strided_slice %30 {offsets = [0, 0, 0], sizes = [1, 8, 8], strides = [1, 1, 1]} : vector<1x8x32xf32> to vector<1x8x8xf32>
    %36 = vector.extract_strided_slice %30 {offsets = [0, 0, 8], sizes = [1, 8, 8], strides = [1, 1, 1]} : vector<1x8x32xf32> to vector<1x8x8xf32>
    %37 = vector.extract_strided_slice %30 {offsets = [0, 0, 16], sizes = [1, 8, 8], strides = [1, 1, 1]} : vector<1x8x32xf32> to vector<1x8x8xf32>
    %38 = vector.extract_strided_slice %30 {offsets = [0, 0, 24], sizes = [1, 8, 8], strides = [1, 1, 1]} : vector<1x8x32xf32> to vector<1x8x8xf32>
    %39 = tpu.concatenate %35, %36, %37, %38 in 0 : vector<1x8x8xf32>, vector<1x8x8xf32>, vector<1x8x8xf32>, vector<1x8x8xf32> -> vector<4x8x8xf32>
    %40 = vector.extract_strided_slice %32 {offsets = [0, 0, 0], sizes = [1, 8, 8], strides = [1, 1, 1]} : vector<1x8x32xf32> to vector<1x8x8xf32>
    %41 = vector.extract_strided_slice %32 {offsets = [0, 0, 8], sizes = [1, 8, 8], strides = [1, 1, 1]} : vector<1x8x32xf32> to vector<1x8x8xf32>
    %42 = vector.extract_strided_slice %32 {offsets = [0, 0, 16], sizes = [1, 8, 8], strides = [1, 1, 1]} : vector<1x8x32xf32> to vector<1x8x8xf32>
    %43 = vector.extract_strided_slice %32 {offsets = [0, 0, 24], sizes = [1, 8, 8], strides = [1, 1, 1]} : vector<1x8x32xf32> to vector<1x8x8xf32>
    %44 = tpu.concatenate %40, %41, %42, %43 in 0 : vector<1x8x8xf32>, vector<1x8x8xf32>, vector<1x8x8xf32>, vector<1x8x8xf32> -> vector<4x8x8xf32>
    %45 = vector.extract_strided_slice %34 {offsets = [0, 0, 0], sizes = [1, 8, 8], strides = [1, 1, 1]} : vector<1x8x32xf32> to vector<1x8x8xf32>
    %46 = vector.extract_strided_slice %34 {offsets = [0, 0, 8], sizes = [1, 8, 8], strides = [1, 1, 1]} : vector<1x8x32xf32> to vector<1x8x8xf32>
    %47 = vector.extract_strided_slice %34 {offsets = [0, 0, 16], sizes = [1, 8, 8], strides = [1, 1, 1]} : vector<1x8x32xf32> to vector<1x8x8xf32>
    %48 = vector.extract_strided_slice %34 {offsets = [0, 0, 24], sizes = [1, 8, 8], strides = [1, 1, 1]} : vector<1x8x32xf32> to vector<1x8x8xf32>
    %49 = tpu.concatenate %45, %46, %47, %48 in 0 : vector<1x8x8xf32>, vector<1x8x8xf32>, vector<1x8x8xf32>, vector<1x8x8xf32> -> vector<4x8x8xf32>
    "tpu.trace_start"() <{level = 10 : i32, message = "bqd,bkd->bqk"}> : () -> ()
    %cst_23 = arith.constant dense<0.000000e+00> : vector<4x8x8xf32>
    %50 = tpu.matmul %39, %44, %cst_23 {dimension_numbers = #tpu.dot_dimension_numbers<[2], [2], [1], [1], [0, 0, 0, 1, 1, 1], [0], [0]>} : vector<4x8x8xf32>, vector<4x8x8xf32>, vector<4x8x8xf32> -> vector<4x8x8xf32>
    "tpu.trace_stop"() : () -> ()
    %cst_24 = arith.constant dense<0xFF800000> : vector<4x8xf32>
    %51 = vector.multi_reduction <maximumf>, %50, %cst_24 [2] : vector<4x8x8xf32> to vector<4x8xf32>
    %52 = vector.shape_cast %51 : vector<4x8xf32> to vector<4x8x1xf32>
    %53 = vector.broadcast %52 : vector<4x8x1xf32> to vector<4x8x8xf32>
    %54 = arith.subf %50, %53 : vector<4x8x8xf32>
    %55 = math.exp %54 : vector<4x8x8xf32>
    %cst_25 = arith.constant dense<0.000000e+00> : vector<4x8xf32>
    %56 = vector.multi_reduction <add>, %55, %cst_25 [2] : vector<4x8x8xf32> to vector<4x8xf32>
    %57 = vector.shape_cast %56 : vector<4x8xf32> to vector<4x8x1xf32>
    %58 = tpu.reciprocal %57 {approx = true} : vector<4x8x1xf32> -> vector<4x8x1xf32>
    %59 = vector.broadcast %58 : vector<4x8x1xf32> to vector<4x8x8xf32>
    %60 = arith.mulf %55, %59 : vector<4x8x8xf32>
    "tpu.trace_start"() <{level = 10 : i32, message = "bqk,bkd->bqd"}> : () -> ()
    %cst_26 = arith.constant dense<0.000000e+00> : vector<4x8x8xf32>
    %61 = tpu.matmul %60, %49, %cst_26 {dimension_numbers = #tpu.dot_dimension_numbers<[2], [1], [1], [2], [0, 0, 0, 1, 1, 2], [0], [0]>} : vector<4x8x8xf32>, vector<4x8x8xf32>, vector<4x8x8xf32> -> vector<4x8x8xf32>
    "tpu.trace_stop"() : () -> ()
    %62 = vector.extract_strided_slice %60 {offsets = [0, 0, 0], sizes = [1, 8, 8], strides = [1, 1, 1]} : vector<4x8x8xf32> to vector<1x8x8xf32>
    %63 = vector.extract_strided_slice %60 {offsets = [1, 0, 0], sizes = [1, 8, 8], strides = [1, 1, 1]} : vector<4x8x8xf32> to vector<1x8x8xf32>
    %64 = arith.addf %62, %63 : vector<1x8x8xf32>
    %65 = vector.extract_strided_slice %60 {offsets = [2, 0, 0], sizes = [1, 8, 8], strides = [1, 1, 1]} : vector<4x8x8xf32> to vector<1x8x8xf32>
    %66 = arith.addf %64, %65 : vector<1x8x8xf32>
    %67 = vector.extract_strided_slice %60 {offsets = [3, 0, 0], sizes = [1, 8, 8], strides = [1, 1, 1]} : vector<4x8x8xf32> to vector<1x8x8xf32>
    %68 = arith.addf %66, %67 : vector<1x8x8xf32>
    %cst_27 = arith.constant 2.500000e-01 : f32
    %69 = vector.broadcast %cst_27 : f32 to vector<1x8x8xf32>
    %70 = arith.mulf %68, %69 : vector<1x8x8xf32>
    %71 = vector.extract_strided_slice %61 {offsets = [0, 0, 0], sizes = [1, 8, 8], strides = [1, 1, 1]} : vector<4x8x8xf32> to vector<1x8x8xf32>
    %72 = vector.extract_strided_slice %61 {offsets = [1, 0, 0], sizes = [1, 8, 8], strides = [1, 1, 1]} : vector<4x8x8xf32> to vector<1x8x8xf32>
    %73 = vector.extract_strided_slice %61 {offsets = [2, 0, 0], sizes = [1, 8, 8], strides = [1, 1, 1]} : vector<4x8x8xf32> to vector<1x8x8xf32>
    %74 = vector.extract_strided_slice %61 {offsets = [3, 0, 0], sizes = [1, 8, 8], strides = [1, 1, 1]} : vector<4x8x8xf32> to vector<1x8x8xf32>
    %75 = tpu.concatenate %71, %72, %73, %74 in 2 : vector<1x8x8xf32>, vector<1x8x8xf32>, vector<1x8x8xf32>, vector<1x8x8xf32> -> vector<1x8x32xf32>
    %76 = vector.shape_cast %75 : vector<1x8x32xf32> to vector<8x32xf32>
    %cst_28 = arith.constant dense<0.000000e+00> : vector<8x32xf32>
    %77 = tpu.matmul %76, %7, %cst_28 {dimension_numbers = #tpu.dot_dimension_numbers<[1], [0], [0], [1], [0, 0, 1, 1], [], []>} : vector<8x32xf32>, vector<32x32xf32>, vector<8x32xf32> -> vector<8x32xf32>
    %78 = vector.broadcast %15 : vector<1x32xf32> to vector<8x32xf32>
    %79 = arith.addf %77, %78 : vector<8x32xf32>
    %80 = arith.addf %28, %79 : vector<8x32xf32>
    %cst_29 = arith.constant dense<0.000000e+00> : vector<8xf32>
    %81 = vector.multi_reduction <add>, %80, %cst_29 [1] : vector<8x32xf32> to vector<8xf32>
    %82 = vector.shape_cast %81 : vector<8xf32> to vector<8x1xf32>
    %cst_30 = arith.constant 3.200000e+01 : f32
    %83 = vector.broadcast %cst_30 : f32 to vector<8x1xf32>
    %84 = arith.divf %82, %83 : vector<8x1xf32>
    %85 = vector.broadcast %84 : vector<8x1xf32> to vector<8x32xf32>
    %86 = arith.subf %80, %85 : vector<8x32xf32>
    %87 = arith.mulf %86, %86 : vector<8x32xf32>
    %cst_31 = arith.constant dense<0.000000e+00> : vector<8xf32>
    %88 = vector.multi_reduction <add>, %87, %cst_31 [1] : vector<8x32xf32> to vector<8xf32>
    %89 = vector.shape_cast %88 : vector<8xf32> to vector<8x1xf32>
    %cst_32 = arith.constant 3.200000e+01 : f32
    %90 = vector.broadcast %cst_32 : f32 to vector<8x1xf32>
    %91 = arith.divf %89, %90 : vector<8x1xf32>
    %92 = vector.broadcast %84 : vector<8x1xf32> to vector<8x32xf32>
    %93 = arith.subf %80, %92 : vector<8x32xf32>
    %cst_33 = arith.constant 9.99999974E-6 : f32
    %94 = vector.broadcast %cst_33 : f32 to vector<8x1xf32>
    %95 = arith.addf %91, %94 : vector<8x1xf32>
    %96 = math.rsqrt %95 : vector<8x1xf32>
    %97 = vector.broadcast %96 : vector<8x1xf32> to vector<8x32xf32>
    %98 = arith.mulf %93, %97 : vector<8x32xf32>
    %99 = vector.broadcast %16 : vector<1x32xf32> to vector<8x32xf32>
    %100 = arith.mulf %98, %99 : vector<8x32xf32>
    %101 = vector.broadcast %17 : vector<1x32xf32> to vector<8x32xf32>
    %102 = arith.addf %100, %101 : vector<8x32xf32>
    %cst_34 = arith.constant dense<0.000000e+00> : vector<8x32xf32>
    %103 = tpu.matmul %102, %9, %cst_34 {dimension_numbers = #tpu.dot_dimension_numbers<[1], [0], [0], [1], [0, 0, 1, 1], [], []>} : vector<8x32xf32>, vector<32x32xf32>, vector<8x32xf32> -> vector<8x32xf32>
    %104 = vector.broadcast %18 : vector<1x32xf32> to vector<8x32xf32>
    %105 = arith.addf %103, %104 : vector<8x32xf32>
    %cst_35 = arith.constant 0.000000e+00 : f32
    %106 = vector.broadcast %cst_35 : f32 to vector<8x32xf32>
    %107 = arith.maximumf %105, %106 : vector<8x32xf32>
    %cst_36 = arith.constant dense<0.000000e+00> : vector<8x32xf32>
    %108 = tpu.matmul %107, %11, %cst_36 {dimension_numbers = #tpu.dot_dimension_numbers<[1], [0], [0], [1], [0, 0, 1, 1], [], []>} : vector<8x32xf32>, vector<32x32xf32>, vector<8x32xf32> -> vector<8x32xf32>
    %109 = vector.broadcast %19 : vector<1x32xf32> to vector<8x32xf32>
    %110 = arith.addf %108, %109 : vector<8x32xf32>
    %111 = arith.addf %102, %110 : vector<8x32xf32>
    %cst_37 = arith.constant dense<0.000000e+00> : vector<8xf32>
    %112 = vector.multi_reduction <add>, %111, %cst_37 [1] : vector<8x32xf32> to vector<8xf32>
    %113 = vector.shape_cast %112 : vector<8xf32> to vector<8x1xf32>
    %cst_38 = arith.constant 3.200000e+01 : f32
    %114 = vector.broadcast %cst_38 : f32 to vector<8x1xf32>
    %115 = arith.divf %113, %114 : vector<8x1xf32>
    %116 = vector.broadcast %115 : vector<8x1xf32> to vector<8x32xf32>
    %117 = arith.subf %111, %116 : vector<8x32xf32>
    %118 = arith.mulf %117, %117 : vector<8x32xf32>
    %cst_39 = arith.constant dense<0.000000e+00> : vector<8xf32>
    %119 = vector.multi_reduction <add>, %118, %cst_39 [1] : vector<8x32xf32> to vector<8xf32>
    %120 = vector.shape_cast %119 : vector<8xf32> to vector<8x1xf32>
    %cst_40 = arith.constant 3.200000e+01 : f32
    %121 = vector.broadcast %cst_40 : f32 to vector<8x1xf32>
    %122 = arith.divf %120, %121 : vector<8x1xf32>
    %123 = vector.broadcast %115 : vector<8x1xf32> to vector<8x32xf32>
    %124 = arith.subf %111, %123 : vector<8x32xf32>
    %cst_41 = arith.constant 9.99999974E-6 : f32
    %125 = vector.broadcast %cst_41 : f32 to vector<8x1xf32>
    %126 = arith.addf %122, %125 : vector<8x1xf32>
    %127 = math.rsqrt %126 : vector<8x1xf32>
    %128 = vector.broadcast %127 : vector<8x1xf32> to vector<8x32xf32>
    %129 = arith.mulf %124, %128 : vector<8x32xf32>
    %130 = vector.broadcast %20 : vector<1x32xf32> to vector<8x32xf32>
    %131 = arith.mulf %129, %130 : vector<8x32xf32>
    %132 = vector.broadcast %21 : vector<1x32xf32> to vector<8x32xf32>
    %133 = arith.addf %131, %132 : vector<8x32xf32>
    %c0_42 = arith.constant 0 : index
    %c0_43 = arith.constant 0 : index
    %134 = vector.load %arg7[%c0_42, %c0_43] : memref<8x64xf32, #tpu.memory_space<vmem>>, vector<8x32xf32>
    tpu.vector_store %arg7[%c0_42, %c0_43], %133 {strides = array<i32>} : memref<8x64xf32, #tpu.memory_space<vmem>>, vector<8x32xf32>,
    %c0_44 = arith.constant 0 : index
    %c32 = arith.constant 32 : index
    %135 = vector.load %arg7[%c0_44, %c32] : memref<8x64xf32, #tpu.memory_space<vmem>>, vector<8x32xf32>
    tpu.vector_store %arg7[%c0_44, %c32], %79 {strides = array<i32>} : memref<8x64xf32, #tpu.memory_space<vmem>>, vector<8x32xf32>,
    %c0_45 = arith.constant 0 : index
    %c0_46 = arith.constant 0 : index
    %c0_47 = arith.constant 0 : index
    %136 = vector.load %arg8[%c0_45, %c0_46, %c0_47] : memref<1x8x8xf32, #tpu.memory_space<vmem>>, vector<1x8x8xf32>
    tpu.vector_store %arg8[%c0_45, %c0_46, %c0_47], %70 {strides = array<i32>} : memref<1x8x8xf32, #tpu.memory_space<vmem>>, vector<1x8x8xf32>,
    return
  }
  func.func @transform_0(%arg0: i32) -> (i32, i32) {
    %c0_i32 = arith.constant 0 : i32
    %c0_i32_0 = arith.constant 0 : i32
    return %arg0, %c0_i32 : i32, i32
  }
  func.func @transform_1(%arg0: i32) -> (i32, i32) {
    %c0_i32 = arith.constant 0 : i32
    %c0_i32_0 = arith.constant 0 : i32
    return %arg0, %c0_i32 : i32, i32
  }
  func.func @transform_2(%arg0: i32) -> (i32, i32, i32) {
    %c0_i32 = arith.constant 0 : i32
    %c0_i32_0 = arith.constant 0 : i32
    %c0_i32_1 = arith.constant 0 : i32
    %c0_i32_2 = arith.constant 0 : i32
    return %c0_i32, %c0_i32_0, %c0_i32_1 : i32, i32, i32
  }
  func.func @transform_3(%arg0: i32) -> (i32, i32, i32) {
    %c0_i32 = arith.constant 0 : i32
    %c0_i32_0 = arith.constant 0 : i32
    %c0_i32_1 = arith.constant 0 : i32
    %c0_i32_2 = arith.constant 0 : i32
    return %c0_i32, %c0_i32_0, %c0_i32_1 : i32, i32, i32
  }
  func.func @transform_4(%arg0: i32) -> (i32, i32) {
    %c0_i32 = arith.constant 0 : i32
    %c0_i32_0 = arith.constant 0 : i32
    %c0_i32_1 = arith.constant 0 : i32
    return %c0_i32, %c0_i32_0 : i32, i32
  }
  func.func @transform_5(%arg0: i32) -> (i32, i32) {
    %c0_i32 = arith.constant 0 : i32
    %c0_i32_0 = arith.constant 0 : i32
    %c0_i32_1 = arith.constant 0 : i32
    return %c0_i32, %c0_i32_0 : i32, i32
  }
  func.func @transform_6(%arg0: i32) -> (i32, i32) {
    %c0_i32 = arith.constant 0 : i32
    %c0_i32_0 = arith.constant 0 : i32
    return %arg0, %c0_i32 : i32, i32
  }
  func.func @transform_7(%arg0: i32) -> (i32, i32, i32) {
    %c0_i32 = arith.constant 0 : i32
    %c0_i32_0 = arith.constant 0 : i32
    %c0_i32_1 = arith.constant 0 : i32
    return %arg0, %c0_i32, %c0_i32_0 : i32, i32, i32
  }
}

</mosaic_0001>

<llo_original>
// kernel: tpu_custom_call.1
$region0: #{tpu_custom_call.1}
  #allocation0 [shape = 'u32[]', space=smem, size = 0x4, offset = 0x4, fixed_abs, tag = 'smem constant byte address 0x4 - core index']
  #allocation1 [shape = 'u32[144,128]{1,0:T(1,128)}', space=vmem, size = 0x12000, scoped, tag = 'internal scratch']
  %s0 = inlined_call_operand.hbm [shape: f32[16,32], index: 0, kind: input, shape index: {}]
  %s1 = inlined_call_operand.hbm [shape: f32[16,32], index: 1, kind: input, shape index: {}]
  %s2 = inlined_call_operand.hbm [shape: f32[2,32,64], index: 2, kind: input, shape index: {}]
  %s3 = inlined_call_operand.hbm [shape: f32[3,32,32], index: 3, kind: input, shape index: {}]
  %s4 = inlined_call_operand.vmem [shape: f32[2,64], index: 4, kind: input, shape index: {}]
  %s5 = inlined_call_operand.vmem [shape: f32[8,32], index: 5, kind: input, shape index: {}]
  %s6 = inlined_call_operand.hbm [shape: f32[16,64], index: 6, kind: output, shape index: {0}]
  %s7 = inlined_call_operand.hbm [shape: f32[2,8,8], index: 7, kind: output, shape index: {1}]
  %8 = xla_tuple %s6, %s7
  %s9 = sld [smem:[#allocation0]]
  $region81: #{tpu_custom_call.1} parent=0
    _
  %s11 = ssub.s32 1, %s9
  %s12 = scalar_select 0, %s11, %s9
  $region1: #{tpu_custom_call.1} parent=0
    #allocation2 [shape = 'u8[8192]{0}', space=vmem, size = 0x2000, scoped, tag = 'input window, operand 0']
    #allocation3 [shape = 's32[2]{0}', space=sflag, size = 0x8, scoped, tag = 'scoped memory for tpu_custom_call.1']
    #allocation4 [shape = 's32[2]{0}', space=sflag, size = 0x8, scoped, tag = 'scoped memory for tpu_custom_call.1']
    #allocation5 [shape = 'u8[8192]{0}', space=vmem, size = 0x2000, scoped, tag = 'input window, operand 1']
    #allocation6 [shape = 's32[2]{0}', space=sflag, size = 0x8, scoped, tag = 'scoped memory for tpu_custom_call.1']
    #allocation7 [shape = 'u8[32768]{0}', space=vmem, size = 0x8000, scoped, tag = 'input window, operand 2, single buffered']
    #allocation8 [shape = 'u8[49152]{0}', space=vmem, size = 0xc000, scoped, tag = 'input window, operand 3, single buffered']
    #allocation9 [shape = 's32[1]{0}', space=sflag, size = 0x4, scoped, tag = 'scoped memory for tpu_custom_call.1']
    #allocation10 [shape = 'u8[8192]{0}', space=vmem, size = 0x2000, scoped, tag = 'output window, operand 0']
    #allocation11 [shape = 'u8[8192]{0}', space=vmem, size = 0x2000, scoped, tag = 'output window, operand 1']
    #allocation12 [shape = 's32[2]{0}', space=sflag, size = 0x8, scoped, tag = 'scoped memory for tpu_custom_call.1']
    %13 = vsyncpa [#allocation3], 0
    %s14 = scalar_lea.sflag [#allocation3], 1
    %15 = vsyncpa %s14, 0
    %16 = vsyncpa [#allocation6], 0
    %s17 = scalar_lea.sflag [#allocation6], 1
    %18 = vsyncpa %s17, 0
    %19 = vsyncpa [#allocation9], 0
    %20 = vsyncpa [#allocation4], 0
    %s21 = scalar_lea.sflag [#allocation4], 1
    %22 = vsyncpa %s21, 0
    %23 = vsyncpa [#allocation12], 0
    %s24 = scalar_lea.sflag [#allocation12], 1
    %25 = vsyncpa %s24, 0
    loop: start=0, step=1, limit=4
    $region2: #{tpu_custom_call.1} parent=1 // loop_pre_header
      _
    $region3: #{tpu_custom_call.1} parent=1 // loop_header
      %s27 = sphi 0, %s31
      %p28 = scmp.ge.s32.totalorder %s27, 4
      %s37 = sphi 0, %s39
      %s40 = sphi 0, %s37
      %s41 = sphi 0, %s40
      %s57 = sphi 0, %s41
      %s63 = sphi 0, %s65
      %s66 = sphi 0, %s63
      %s67 = sphi 0, %s66
      %s83 = sphi 0, %s67
      %s87 = sphi 0, %s87
      %s89 = sphi 0, %s87
      %s90 = sphi 0, %s89
      %s104 = sphi 0, %s90
      %s108 = sphi 0, %s108
      %s110 = sphi 0, %s108
      %s111 = sphi 0, %s110
      %s125 = sphi 0, %s111
      %s129 = sphi 0, %s129
      %s131 = sphi 0, %s129
      %s132 = sphi 0, %s131
      %s146 = sphi 0, %s132
      %s150 = sphi 0, %s150
      %s152 = sphi 0, %s150
      %s153 = sphi 0, %s152
      %s167 = sphi 0, %s153
      %s173 = sphi 0, %s175
      %s176 = sphi 0, %s173
      %s177 = sphi 0, %s176
      %s193 = sphi 0, %s177
      %s199 = sphi 0, %s201
      %s202 = sphi 0, %s199
      %s203 = sphi 0, %s202
      %s219 = sphi 0, %s203
    $region4: #{tpu_custom_call.1} parent=1 // loop_header_branch
      %30 = sbr.rel (%p28) target = $region8
    $region5: #{tpu_custom_call.1} parent=1 // loop_body
      %s32 = ssub.s32 %s27, 1
      %s33 = ssub.s32 %s27, 2
      %s34 = sadd.s32 %s27, 1
      %s35 = ssub.s32 %s27, %s34
      %p36 = scmp.eq.s32.totalorder %s35, 0
      %s38 = sadd.s32 %s37, 1
      %s39 = scalar_select %p36, %s37, %s38
      %p42 = pneg %p36
      %p43 = scmp.eq.s32.totalorder %s27, 1
      %p44 = por %p42, %p43
      %p45 = scmp.ne.s32.totalorder %s37, %s40
      %p46 = scmp.eq.s32.totalorder %s27, 0
      %p47 = por %p45, %p46
      %p48 = scmp.ne.s32.totalorder %s37, %s40
      %p49 = scmp.eq.s32.totalorder %s32, 1
      %p50 = por %p48, %p49
      %p51 = scmp.ne.s32.totalorder %s40, %s41
      %p52 = scmp.eq.s32.totalorder %s32, 0
      %p53 = por %p51, %p52
      %p54 = scmp.ne.s32.totalorder %s40, %s41
      %p55 = scmp.eq.s32.totalorder %s33, 1
      %p56 = por %p54, %p55
      %p58 = scmp.ne.s32.totalorder %s41, %s57
      %p59 = scmp.eq.s32.totalorder %s33, 0
      %p60 = por %p58, %p59
      %s61 = ssub.s32 %s27, %s34
      %p62 = scmp.eq.s32.totalorder %s61, 0
      %s64 = sadd.s32 %s63, 1
      %s65 = scalar_select %p62, %s63, %s64
      %p68 = pneg %p62
      %p69 = scmp.eq.s32.totalorder %s27, 1
      %p70 = por %p68, %p69
      %p71 = scmp.ne.s32.totalorder %s63, %s66
      %p72 = scmp.eq.s32.totalorder %s27, 0
      %p73 = por %p71, %p72
      %p74 = scmp.ne.s32.totalorder %s63, %s66
      %p75 = scmp.eq.s32.totalorder %s32, 1
      %p76 = por %p74, %p75
      %p77 = scmp.ne.s32.totalorder %s66, %s67
      %p78 = scmp.eq.s32.totalorder %s32, 0
      %p79 = por %p77, %p78
      %p80 = scmp.ne.s32.totalorder %s66, %s67
      %p81 = scmp.eq.s32.totalorder %s33, 1
      %p82 = por %p80, %p81
      %p84 = scmp.ne.s32.totalorder %s67, %s83
      %p85 = scmp.eq.s32.totalorder %s33, 0
      %p86 = por %p84, %p85
      %s88 = sadd.s32 %s87, 1
      %p91 = scmp.eq.s32.totalorder %s27, 1
      %p92 = scmp.ne.s32.totalorder %s87, %s89
      %p93 = scmp.eq.s32.totalorder %s27, 0
      %p94 = por %p92, %p93
      %p95 = scmp.ne.s32.totalorder %s87, %s89
      %p96 = scmp.eq.s32.totalorder %s32, 1
      %p97 = por %p95, %p96
      %p98 = scmp.ne.s32.totalorder %s89, %s90
      %p99 = scmp.eq.s32.totalorder %s32, 0
      %p100 = por %p98, %p99
      %p101 = scmp.ne.s32.totalorder %s89, %s90
      %p102 = scmp.eq.s32.totalorder %s33, 1
      %p103 = por %p101, %p102
      %p105 = scmp.ne.s32.totalorder %s90, %s104
      %p106 = scmp.eq.s32.totalorder %s33, 0
      %p107 = por %p105, %p106
      %s109 = sadd.s32 %s108, 1
      %p112 = scmp.eq.s32.totalorder %s27, 1
      %p113 = scmp.ne.s32.totalorder %s108, %s110
      %p114 = scmp.eq.s32.totalorder %s27, 0
      %p115 = por %p113, %p114
      %p116 = scmp.ne.s32.totalorder %s108, %s110
      %p117 = scmp.eq.s32.totalorder %s32, 1
      %p118 = por %p116, %p117
      %p119 = scmp.ne.s32.totalorder %s110, %s111
      %p120 = scmp.eq.s32.totalorder %s32, 0
      %p121 = por %p119, %p120
      %p122 = scmp.ne.s32.totalorder %s110, %s111
      %p123 = scmp.eq.s32.totalorder %s33, 1
      %p124 = por %p122, %p123
      %p126 = scmp.ne.s32.totalorder %s111, %s125
      %p127 = scmp.eq.s32.totalorder %s33, 0
      %p128 = por %p126, %p127
      %s130 = sadd.s32 %s129, 1
      %p133 = scmp.eq.s32.totalorder %s27, 1
      %p134 = scmp.ne.s32.totalorder %s129, %s131
      %p135 = scmp.eq.s32.totalorder %s27, 0
      %p136 = por %p134, %p135
      %p137 = scmp.ne.s32.totalorder %s129, %s131
      %p138 = scmp.eq.s32.totalorder %s32, 1
      %p139 = por %p137, %p138
      %p140 = scmp.ne.s32.totalorder %s131, %s132
      %p141 = scmp.eq.s32.totalorder %s32, 0
      %p142 = por %p140, %p141
      %p143 = scmp.ne.s32.totalorder %s131, %s132
      %p144 = scmp.eq.s32.totalorder %s33, 1
      %p145 = por %p143, %p144
      %p147 = scmp.ne.s32.totalorder %s132, %s146
      %p148 = scmp.eq.s32.totalorder %s33, 0
      %p149 = por %p147, %p148
      %s151 = sadd.s32 %s150, 1
      %p154 = scmp.eq.s32.totalorder %s27, 1
      %p155 = scmp.ne.s32.totalorder %s150, %s152
      %p156 = scmp.eq.s32.totalorder %s27, 0
      %p157 = por %p155, %p156
      %p158 = scmp.ne.s32.totalorder %s150, %s152
      %p159 = scmp.eq.s32.totalorder %s32, 1
      %p160 = por %p158, %p159
      %p161 = scmp.ne.s32.totalorder %s152, %s153
      %p162 = scmp.eq.s32.totalorder %s32, 0
      %p163 = por %p161, %p162
      %p164 = scmp.ne.s32.totalorder %s152, %s153
      %p165 = scmp.eq.s32.totalorder %s33, 1
      %p166 = por %p164, %p165
      %p168 = scmp.ne.s32.totalorder %s153, %s167
      %p169 = scmp.eq.s32.totalorder %s33, 0
      %p170 = por %p168, %p169
      %s171 = ssub.s32 %s27, %s34
      %p172 = scmp.eq.s32.totalorder %s171, 0
      %s174 = sadd.s32 %s173, 1
      %s175 = scalar_select %p172, %s173, %s174
      %p178 = pneg %p172
      %p179 = scmp.eq.s32.totalorder %s27, 1
      %p180 = por %p178, %p179
      %p181 = scmp.ne.s32.totalorder %s173, %s176
      %p182 = scmp.eq.s32.totalorder %s27, 0
      %p183 = por %p181, %p182
      %p184 = scmp.ne.s32.totalorder %s173, %s176
      %p185 = scmp.eq.s32.totalorder %s32, 1
      %p186 = por %p184, %p185
      %p187 = scmp.ne.s32.totalorder %s176, %s177
      %p188 = scmp.eq.s32.totalorder %s32, 0
      %p189 = por %p187, %p188
      %p190 = scmp.ne.s32.totalorder %s176, %s177
      %p191 = scmp.eq.s32.totalorder %s33, 1
      %p192 = por %p190, %p191
      %p194 = scmp.ne.s32.totalorder %s177, %s193
      %p195 = scmp.eq.s32.totalorder %s33, 0
      %p196 = por %p194, %p195
      %s197 = ssub.s32 %s27, %s34
      %p198 = scmp.eq.s32.totalorder %s197, 0
      %s200 = sadd.s32 %s199, 1
      %s201 = scalar_select %p198, %s199, %s200
      %p204 = pneg %p198
      %p205 = scmp.eq.s32.totalorder %s27, 1
      %p206 = por %p204, %p205
      %p207 = scmp.ne.s32.totalorder %s199, %s202
      %p208 = scmp.eq.s32.totalorder %s27, 0
      %p209 = por %p207, %p208
      %p210 = scmp.ne.s32.totalorder %s199, %s202
      %p211 = scmp.eq.s32.totalorder %s32, 1
      %p212 = por %p210, %p211
      %p213 = scmp.ne.s32.totalorder %s202, %s203
      %p214 = scmp.eq.s32.totalorder %s32, 0
      %p215 = por %p213, %p214
      %p216 = scmp.ne.s32.totalorder %s202, %s203
      %p217 = scmp.eq.s32.totalorder %s33, 1
      %p218 = por %p216, %p217
      %p220 = scmp.ne.s32.totalorder %s203, %s219
      %p221 = scmp.eq.s32.totalorder %s33, 0
      %p222 = por %p220, %p221
      %p223 = scmp.le.s32.totalorder 1, %s27
      %p224 = scmp.lt.s32.totalorder %s27, 3
      %p225 = pnand %p223, %p224
      %p226 = pneg %p225
      // Predicated region
      $region9: #{tpu_custom_call.1} parent=5 // pred_check
        _
      $region10: #{tpu_custom_call.1} parent=5 // pred_check_branch
        %228 = sbr.rel (%p225) target = $region12
      $region11: #{tpu_custom_call.1} parent=5 // pred_region
        %s229 = ssub.s32 %s27, 1
        // Predicated region
        $region13: #{tpu_custom_call.1} parent=11 // pred_check
          %p230 = pneg %p100
        $region14: #{tpu_custom_call.1} parent=11 // pred_check_branch
          %232 = sbr.rel (%p230) target = $region16
        $region15: #{tpu_custom_call.1} parent=11 // pred_region
          %s234 = ssub.s32 1024, 1024
          %235 = vsyncadd [#allocation6], %s234
          %s236 = sshll.u32 [#allocation7], 4
          %s237 = int_to_ptr.vmem [resolvable:$true] %s236
          %242 = dma.hbm_to_vmem [thread:$0]  %s2, 1024, %s237, [#allocation6], 128, 128, 8
        $region16: #{tpu_custom_call.1} parent=11 // pred_fallthru
          _
        // Predicated region
        $region17: #{tpu_custom_call.1} parent=11 // pred_check
          %p243 = pneg %p121
        $region18: #{tpu_custom_call.1} parent=11 // pred_check_branch
          %245 = sbr.rel (%p243) target = $region20
        $region19: #{tpu_custom_call.1} parent=11 // pred_region
          %s247 = ssub.s32 1536, 1536
          %248 = vsyncadd [#allocation9], %s247
          %s249 = sshll.u32 [#allocation8], 4
          %s250 = int_to_ptr.vmem [resolvable:$true] %s249
          %255 = dma.hbm_to_vmem [thread:$0]  %s3, 1536, %s250, [#allocation9], 128, 128, 8
        $region20: #{tpu_custom_call.1} parent=11 // pred_fallthru
          _
        // Predicated region
        $region21: #{tpu_custom_call.1} parent=11 // pred_check
          %p256 = pneg %p142
        $region22: #{tpu_custom_call.1} parent=11 // pred_check_branch
          %258 = sbr.rel (%p256) target = $region24
        $region23: #{tpu_custom_call.1} parent=11 // pred_region
          _
        $region24: #{tpu_custom_call.1} parent=11 // pred_fallthru
          _
        // Predicated region
        $region25: #{tpu_custom_call.1} parent=11 // pred_check
          %p259 = pneg %p163
        $region26: #{tpu_custom_call.1} parent=11 // pred_check_branch
          %261 = sbr.rel (%p259) target = $region28
        $region27: #{tpu_custom_call.1} parent=11 // pred_region
          _
        $region28: #{tpu_custom_call.1} parent=11 // pred_fallthru
          _
      $region12: #{tpu_custom_call.1} parent=5 // pred_fallthru
        _
      %p262 = scmp.lt.s32.totalorder %s27, 2
      // Predicated region
      $region29: #{tpu_custom_call.1} parent=5 // pred_check
        %p263 = pneg %p262
      $region30: #{tpu_custom_call.1} parent=5 // pred_check_branch
        %265 = sbr.rel (%p263) target = $region32
      $region31: #{tpu_custom_call.1} parent=5 // pred_region
        // Predicated region
        $region33: #{tpu_custom_call.1} parent=31 // pred_check
          %p266 = pneg %p47
        $region34: #{tpu_custom_call.1} parent=31 // pred_check_branch
          %268 = sbr.rel (%p266) target = $region36
        $region35: #{tpu_custom_call.1} parent=31 // pred_region
          %s269 = sand.u32 %s37, 1
          %s270 = scalar_lea.sflag [#allocation3], %s269
          %s271 = sand.u32 %s37, 1
          %s272 = smul.addr %s271, 8
          %s273 = scalar_lea.vmem [#allocation2], %s272
          %s275 = ssub.s32 128, 128
          %276 = vsyncadd %s270, %s275
          %s277 = smul.addr %s27, 128
          %s278 = scalar_lea.hbm %s0, %s277
          %s280 = sshll.u32 %s273, 4
          %s281 = int_to_ptr.vmem [resolvable:$true] %s280
          %283 = dma.hbm_to_vmem [thread:$0]  %s278, 128, %s281, %s270
        $region36: #{tpu_custom_call.1} parent=31 // pred_fallthru
          _
        // Predicated region
        $region37: #{tpu_custom_call.1} parent=31 // pred_check
          %p284 = pneg %p73
        $region38: #{tpu_custom_call.1} parent=31 // pred_check_branch
          %286 = sbr.rel (%p284) target = $region40
        $region39: #{tpu_custom_call.1} parent=31 // pred_region
          %s287 = sand.u32 %s27, 1
          %s288 = scalar_lea.sflag [#allocation6], %s287
          %s289 = sand.u32 %s63, 1
          %s290 = smul.addr %s289, 8
          %s291 = scalar_lea.vmem [#allocation5], %s290
          %s293 = ssub.s32 128, 128
          %294 = vsyncadd %s288, %s293
          %s295 = smul.addr %s27, 128
          %s296 = scalar_lea.hbm %s1, %s295
          %s298 = sshll.u32 %s291, 4
          %s299 = int_to_ptr.vmem [resolvable:$true] %s298
          %301 = dma.hbm_to_vmem [thread:$0]  %s296, 128, %s299, %s288
        $region40: #{tpu_custom_call.1} parent=31 // pred_fallthru
          _
      $region32: #{tpu_custom_call.1} parent=5 // pred_fallthru
        _
      %p302 = scmp.le.s32.totalorder 1, %s27
      %p303 = scmp.lt.s32.totalorder %s27, 3
      %p304 = pnand %p302, %p303
      %p305 = pneg %p304
      // Predicated region
      $region41: #{tpu_custom_call.1} parent=5 // pred_check
        _
      $region42: #{tpu_custom_call.1} parent=5 // pred_check_branch
        %307 = sbr.rel (%p304) target = $region44
      $region43: #{tpu_custom_call.1} parent=5 // pred_region
        %s308 = ssub.s32 %s27, 1
        %s309 = sand.u32 %s40, 1
        %s310 = scalar_lea.sflag [#allocation3], %s309
        %s311 = sand.u32 %s40, 1
        %s312 = smul.addr %s311, 8
        %s313 = scalar_lea.vmem [#allocation2], %s312
        // Predicated region
        $region45: #{tpu_custom_call.1} parent=43 // pred_check
          %p314 = pneg %p53
        $region46: #{tpu_custom_call.1} parent=43 // pred_check_branch
          %316 = sbr.rel (%p314) target = $region48
        $region47: #{tpu_custom_call.1} parent=43 // pred_region
          %317 = dma.done %s310, 128
        $region48: #{tpu_custom_call.1} parent=43 // pred_fallthru
          _
        %s318 = sand.u32 %s32, 1
        %s319 = scalar_lea.sflag [#allocation6], %s318
        %s320 = sand.u32 %s66, 1
        %s321 = smul.addr %s320, 8
        %s322 = scalar_lea.vmem [#allocation5], %s321
        // Predicated region
        $region49: #{tpu_custom_call.1} parent=43 // pred_check
          %p323 = pneg %p79
        $region50: #{tpu_custom_call.1} parent=43 // pred_check_branch
          %325 = sbr.rel (%p323) target = $region52
        $region51: #{tpu_custom_call.1} parent=43 // pred_region
          %326 = dma.done %s319, 128
        $region52: #{tpu_custom_call.1} parent=43 // pred_fallthru
          _
        // Predicated region
        $region53: #{tpu_custom_call.1} parent=43 // pred_check
          %p327 = pneg %p100
        $region54: #{tpu_custom_call.1} parent=43 // pred_check_branch
          %329 = sbr.rel (%p327) target = $region56
        $region55: #{tpu_custom_call.1} parent=43 // pred_region
          %330 = dma.done [#allocation6], 1024
        $region56: #{tpu_custom_call.1} parent=43 // pred_fallthru
          _
        // Predicated region
        $region57: #{tpu_custom_call.1} parent=43 // pred_check
          %p331 = pneg %p121
        $region58: #{tpu_custom_call.1} parent=43 // pred_check_branch
          %333 = sbr.rel (%p331) target = $region60
        $region59: #{tpu_custom_call.1} parent=43 // pred_region
          %334 = dma.done [#allocation9], 1536
        $region60: #{tpu_custom_call.1} parent=43 // pred_fallthru
          _
        %s335 = sand.u32 %s40, 1
        %s336 = scalar_lea.sflag [#allocation3], %s335
        %s337 = sand.u32 %s40, 1
        %s338 = smul.addr %s337, 8
        %s339 = scalar_lea.vmem [#allocation2], %s338
        %p340 = pneg %p53
        %p341 = pneg %p50
        %s342 = sand.u32 %s32, 1
        %s343 = scalar_lea.sflag [#allocation6], %s342
        %s344 = sand.u32 %s66, 1
        %s345 = smul.addr %s344, 8
        %s346 = scalar_lea.vmem [#allocation5], %s345
        %p347 = pneg %p79
        %p348 = pneg %p76
        %p349 = pneg %p100
        %p350 = pneg %p97
        %p351 = pneg %p121
        %p352 = pneg %p118
        %p353 = pneg %p142
        %p354 = pneg %p139
        %p355 = pneg %p163
        %p356 = pneg %p160
        %p357 = pneg %p189
        %p358 = pneg %p186
        %s359 = sand.u32 %s176, 1
        %s360 = scalar_lea.sflag [#allocation4], %s359
        %s361 = sand.u32 %s176, 1
        %s362 = smul.addr %s361, 8
        %s363 = scalar_lea.vmem [#allocation10], %s362
        %p364 = pneg %p215
        %p365 = pneg %p212
        %s366 = sand.u32 %s202, 1
        %s367 = scalar_lea.sflag [#allocation12], %s366
        %s368 = sand.u32 %s202, 1
        %s369 = smul.addr %s368, 8
        %s370 = scalar_lea.vmem [#allocation11], %s369
        %v371 = vld [vmem:[%s313] sm:$0xff]
        %v372 = vld [vmem:[%s322] sm:$0xff]
        %v373 = vld [vmem:[#allocation7] sm:$0xff]
        %v374 = vld [vmem:[#allocation7 + $0x8] sm:$0xff]
        %v375 = vld [vmem:[#allocation7 + $0x10] sm:$0xff]
        %v376 = vld [vmem:[#allocation7 + $0x18] sm:$0xff]
        %s377 = scalar_lea.vmem [#allocation7], 32
        %v378 = vld [vmem:[%s377] sm:$0xff]
        %v379 = vld [vmem:[%s377 + $0x8] sm:$0xff]
        %v380 = vld [vmem:[%s377 + $0x10] sm:$0xff]
        %v381 = vld [vmem:[%s377 + $0x18] sm:$0xff]
        %v382 = vld [vmem:[#allocation8] sm:$0xff]
        %v383 = vld [vmem:[#allocation8 + $0x8] sm:$0xff]
        %v384 = vld [vmem:[#allocation8 + $0x10] sm:$0xff]
        %v385 = vld [vmem:[#allocation8 + $0x18] sm:$0xff]
        %s386 = scalar_lea.vmem [#allocation8], 32
        %v387 = vld [vmem:[%s386] sm:$0xff]
        %v388 = vld [vmem:[%s386 + $0x8] sm:$0xff]
        %v389 = vld [vmem:[%s386 + $0x10] sm:$0xff]
        %v390 = vld [vmem:[%s386 + $0x18] sm:$0xff]
        %s391 = scalar_lea.vmem [#allocation8], 64
        %v392 = vld [vmem:[%s391] sm:$0xff]
        %v393 = vld [vmem:[%s391 + $0x8] sm:$0xff]
        %v394 = vld [vmem:[%s391 + $0x10] sm:$0xff]
        %v395 = vld [vmem:[%s391 + $0x18] sm:$0xff]
        %v396 = vld [vmem:[%s4] sm:$0x1]
        %v397 = vld [vmem:[%s4 + $0x1] sm:$0x1]
        %v398 = vld [vmem:[%s5] sm:$0xff]
        %v399 = vlaneseq
        %v400 = vshrl.u32 %v399, 7
        %v401 = vsub.s32 0, %v400
        %v402 = vrot.slane %v396, %v401
        %vm403 = vcmask 261120
        %v405 = vsel %vm403, %v371, 0
        %407 = vmatprep.subr.mxu0 0.0
        %408 = vmatpush1.msra.mxu0 %v373
        %409 = vmatprep.subr.mxu0 0.0
        %410 = vmatpush1.msra.mxu0 %v374
        %411 = vmatprep.subr.mxu0 0.0
        %412 = vmatpush1.msra.mxu0 %v375
        %413 = vmatprep.subr.mxu0 0.0
        %414 = vmatpush1.msra.mxu0 %v376
        %415 = vmatprep.subr.mxu0 0.0
        %416 = vmatpush1.msra.mxu0 0.0
        %417 = vmatprep.subr.mxu0 0.0
        %418 = vmatpush1.msra.mxu0 0.0
        %419 = vmatprep.subr.mxu0 0.0
        %420 = vmatpush1.msra.mxu0 0.0
        %421 = vmatprep.subr.mxu0 0.0
        %422 = vmatpush1.msra.mxu0 0.0
        %423 = vmatprep.subr.mxu0 0.0
        %424 = vmatpush1.msra.mxu0 0.0
        %425 = vmatprep.subr.mxu0 0.0
        %426 = vmatpush1.msra.mxu0 0.0
        %427 = vmatprep.subr.mxu0 0.0
        %428 = vmatpush1.msra.mxu0 0.0
        %429 = vmatprep.subr.mxu0 0.0
        %430 = vmatpush1.msra.mxu0 0.0
        %431 = vmatprep.subr.mxu0 0.0
        %432 = vmatpush1.msra.mxu0 0.0
        %433 = vmatprep.subr.mxu0 0.0
        %434 = vmatpush1.msra.mxu0 0.0
        %435 = vmatprep.subr.mxu0 0.0
        %436 = vmatpush1.msra.mxu0 0.0
        %437 = vmatprep.subr.mxu0 0.0
        %438 = vmatpush1.msra.mxu0 0.0
        %439 = vmatprep.subr.mxu0 0.0
        %440 = vmatpush1.msra.mxu0 0.0
        %441 = vmatprep.subr.mxu0 0.0
        %442 = vmatpush1.msra.mxu0 0.0
        %443 = vmatprep.subr.mxu0 0.0
        %444 = vmatpush1.msra.mxu0 0.0
        %445 = vmatprep.subr.mxu0 0.0
        %446 = vmatpush1.msra.mxu0 0.0
        %447 = vmatprep.subr.mxu0 0.0
        %448 = vmatpush1.msra.mxu0 0.0
        %449 = vmatprep.subr.mxu0 0.0
        %450 = vmatpush1.msra.mxu0 0.0
        %451 = vmatprep.subr.mxu0 0.0
        %452 = vmatpush1.msra.mxu0 0.0
        %453 = vmatprep.subr.mxu0 0.0
        %454 = vmatpush1.msra.mxu0 0.0
        %455 = vmatprep.subr.mxu0 0.0
        %456 = vmatpush1.msra.mxu0 0.0
        %457 = vmatprep.subr.mxu0 0.0
        %458 = vmatpush1.msra.mxu0 0.0
        %459 = vmatprep.subr.mxu0 0.0
        %460 = vmatpush1.msra.mxu0 0.0
        %461 = vmatprep.subr.mxu0 0.0
        %462 = vmatpush1.msra.mxu0 0.0
        %463 = vmatprep.subr.mxu0 0.0
        %464 = vmatpush1.msra.mxu0 0.0
        %465 = vmatprep.subr.mxu0 0.0
        %466 = vmatpush1.msra.mxu0 0.0
        %467 = vmatprep.subr.mxu0 0.0
        %468 = vmatpush1.msra.mxu0 0.0
        %469 = vmatprep.subr.mxu0 0.0
        %470 = vmatpush1.msra.mxu0 0.0
        %471 = vmatprep.mubr.f32.mxu0 0.0
        %472 = vmatmul.mubr.f32.gmra.mrb[0].mxu0 %v405
        %v473 = vpop.f32.mrb[0].mxu0
        %v474 = vadd.f32 %v402, %v473
        %v475 = vpop.f32.mrb[0].mxu0
        %476 = vdwg.mxu0
        %v477 = vlaneseq
        %v478 = vshrl.u32 %v477, 7
        %v479 = vsub.s32 0, %v478
        %v480 = vrot.slane %v397, %v479
        %v482 = vsel %vm403, %v372, 0
        %484 = vmatprep.subr.mxu0 0.0
        %485 = vmatpush1.msra.mxu0 %v378
        %486 = vmatprep.subr.mxu0 0.0
        %487 = vmatpush1.msra.mxu0 %v379
        %488 = vmatprep.subr.mxu0 0.0
        %489 = vmatpush1.msra.mxu0 %v380
        %490 = vmatprep.subr.mxu0 0.0
        %491 = vmatpush1.msra.mxu0 %v381
        %492 = vmatprep.subr.mxu0 0.0
        %493 = vmatpush1.msra.mxu0 0.0
        %494 = vmatprep.subr.mxu0 0.0
        %495 = vmatpush1.msra.mxu0 0.0
        %496 = vmatprep.subr.mxu0 0.0
        %497 = vmatpush1.msra.mxu0 0.0
        %498 = vmatprep.subr.mxu0 0.0
        %499 = vmatpush1.msra.mxu0 0.0
        %500 = vmatprep.subr.mxu0 0.0
        %501 = vmatpush1.msra.mxu0 0.0
        %502 = vmatprep.subr.mxu0 0.0
        %503 = vmatpush1.msra.mxu0 0.0
        %504 = vmatprep.subr.mxu0 0.0
        %505 = vmatpush1.msra.mxu0 0.0
        %506 = vmatprep.subr.mxu0 0.0
        %507 = vmatpush1.msra.mxu0 0.0
        %508 = vmatprep.subr.mxu0 0.0
        %509 = vmatpush1.msra.mxu0 0.0
        %510 = vmatprep.subr.mxu0 0.0
        %511 = vmatpush1.msra.mxu0 0.0
        %512 = vmatprep.subr.mxu0 0.0
        %513 = vmatpush1.msra.mxu0 0.0
        %514 = vmatprep.subr.mxu0 0.0
        %515 = vmatpush1.msra.mxu0 0.0
        %516 = vmatprep.subr.mxu0 0.0
        %517 = vmatpush1.msra.mxu0 0.0
        %518 = vmatprep.subr.mxu0 0.0
        %519 = vmatpush1.msra.mxu0 0.0
        %520 = vmatprep.subr.mxu0 0.0
        %521 = vmatpush1.msra.mxu0 0.0
        %522 = vmatprep.subr.mxu0 0.0
        %523 = vmatpush1.msra.mxu0 0.0
        %524 = vmatprep.subr.mxu0 0.0
        %525 = vmatpush1.msra.mxu0 0.0
        %526 = vmatprep.subr.mxu0 0.0
        %527 = vmatpush1.msra.mxu0 0.0
        %528 = vmatprep.subr.mxu0 0.0
        %529 = vmatpush1.msra.mxu0 0.0
        %530 = vmatprep.subr.mxu0 0.0
        %531 = vmatpush1.msra.mxu0 0.0
        %532 = vmatprep.subr.mxu0 0.0
        %533 = vmatpush1.msra.mxu0 0.0
        %534 = vmatprep.subr.mxu0 0.0
        %535 = vmatpush1.msra.mxu0 0.0
        %536 = vmatprep.subr.mxu0 0.0
        %537 = vmatpush1.msra.mxu0 0.0
        %538 = vmatprep.subr.mxu0 0.0
        %539 = vmatpush1.msra.mxu0 0.0
        %540 = vmatprep.subr.mxu0 0.0
        %541 = vmatpush1.msra.mxu0 0.0
        %542 = vmatprep.subr.mxu0 0.0
        %543 = vmatpush1.msra.mxu0 0.0
        %544 = vmatprep.subr.mxu0 0.0
        %545 = vmatpush1.msra.mxu0 0.0
        %546 = vmatprep.subr.mxu0 0.0
        %547 = vmatpush1.msra.mxu0 0.0
        %548 = vmatprep.mubr.f32.mxu0 0.0
        %549 = vmatmul.mubr.f32.gmra.mrb[0].mxu0 %v482
        %v550 = vpop.f32.mrb[0].mxu0
        %v551 = vadd.f32 %v480, %v550
        %v552 = vpop.f32.mrb[0].mxu0
        %553 = vdwg.mxu0
        %555 = vrot.lane.b32.xlu0 %v474, 120
        %v556 = vpop.permute.xlu0 %555
        %557 = vrot.lane.b32.xlu0 %v474, 112
        %v558 = vpop.permute.xlu0 %557
        %559 = vrot.lane.b32.xlu0 %v474, 104
        %v560 = vpop.permute.xlu0 %559
        %562 = vrot.lane.b32.xlu0 %v551, 120
        %v563 = vpop.permute.xlu0 %562
        %564 = vrot.lane.b32.xlu0 %v551, 112
        %v565 = vpop.permute.xlu0 %564
        %566 = vrot.lane.b32.xlu0 %v551, 104
        %v567 = vpop.permute.xlu0 %566
        %568 = vrot.lane.b32.xlu0 %v474, 96
        %v569 = vpop.permute.xlu0 %568
        %vm570 = vcmask 64512
        %v571 = vsel %vm570, %v569, 0
        %v573 = vsel %vm570, %v551, 0
        %575 = vmatprep.subr.mxu0 0.0
        %576 = vmatpush1.xpose.msra.mxu0 %v573
        %577 = vmatprep.subr.mxu0 0.0
        %578 = vmatpush1.xpose.msra.mxu0 0.0
        %579 = vmatprep.subr.mxu0 0.0
        %580 = vmatpush1.xpose.msra.mxu0 0.0
        %581 = vmatprep.subr.mxu0 0.0
        %582 = vmatpush1.xpose.msra.mxu0 0.0
        %583 = vmatprep.subr.mxu0 0.0
        %584 = vmatpush1.xpose.msra.mxu0 0.0
        %585 = vmatprep.subr.mxu0 0.0
        %586 = vmatpush1.xpose.msra.mxu0 0.0
        %587 = vmatprep.subr.mxu0 0.0
        %588 = vmatpush1.xpose.msra.mxu0 0.0
        %589 = vmatprep.subr.mxu0 0.0
        %590 = vmatpush1.xpose.msra.mxu0 0.0
        %591 = vmatprep.subr.mxu0 0.0
        %592 = vmatpush1.xpose.msra.mxu0 0.0
        %593 = vmatprep.subr.mxu0 0.0
        %594 = vmatpush1.xpose.msra.mxu0 0.0
        %595 = vmatprep.subr.mxu0 0.0
        %596 = vmatpush1.xpose.msra.mxu0 0.0
        %597 = vmatprep.subr.mxu0 0.0
        %598 = vmatpush1.xpose.msra.mxu0 0.0
        %599 = vmatprep.subr.mxu0 0.0
        %600 = vmatpush1.xpose.msra.mxu0 0.0
        %601 = vmatprep.subr.mxu0 0.0
        %602 = vmatpush1.xpose.msra.mxu0 0.0
        %603 = vmatprep.subr.mxu0 0.0
        %604 = vmatpush1.xpose.msra.mxu0 0.0
        %605 = vmatprep.subr.mxu0 0.0
        %606 = vmatpush1.xpose.msra.mxu0 0.0
        %607 = vmatprep.subr.mxu0 0.0
        %608 = vmatpush1.xpose.msra.mxu0 0.0
        %609 = vmatprep.subr.mxu0 0.0
        %610 = vmatpush1.xpose.msra.mxu0 0.0
        %611 = vmatprep.subr.mxu0 0.0
        %612 = vmatpush1.xpose.msra.mxu0 0.0
        %613 = vmatprep.subr.mxu0 0.0
        %614 = vmatpush1.xpose.msra.mxu0 0.0
        %615 = vmatprep.subr.mxu0 0.0
        %616 = vmatpush1.xpose.msra.mxu0 0.0
        %617 = vmatprep.subr.mxu0 0.0
        %618 = vmatpush1.xpose.msra.mxu0 0.0
        %619 = vmatprep.subr.mxu0 0.0
        %620 = vmatpush1.xpose.msra.mxu0 0.0
        %621 = vmatprep.subr.mxu0 0.0
        %622 = vmatpush1.xpose.msra.mxu0 0.0
        %623 = vmatprep.subr.mxu0 0.0
        %624 = vmatpush1.xpose.msra.mxu0 0.0
        %625 = vmatprep.subr.mxu0 0.0
        %626 = vmatpush1.xpose.msra.mxu0 0.0
        %627 = vmatprep.subr.mxu0 0.0
        %628 = vmatpush1.xpose.msra.mxu0 0.0
        %629 = vmatprep.subr.mxu0 0.0
        %630 = vmatpush1.xpose.msra.mxu0 0.0
        %631 = vmatprep.subr.mxu0 0.0
        %632 = vmatpush1.xpose.msra.mxu0 0.0
        %633 = vmatprep.subr.mxu0 0.0
        %634 = vmatpush1.xpose.msra.mxu0 0.0
        %635 = vmatprep.subr.mxu0 0.0
        %636 = vmatpush1.xpose.msra.mxu0 0.0
        %637 = vmatprep.subr.mxu0 0.0
        %638 = vmatpush1.xpose.msra.mxu0 0.0
        %639 = vmatprep.mubr.f32.mxu0 0.0
        %640 = vmatmul.mubr.f32.gmra.mrb[0].mxu0 %v571
        %v641 = vpop.f32.mrb[0].mxu0
        %v642 = vadd.f32 0.0, %v641
        %v643 = vpop.f32.mrb[0].mxu0
        %644 = vdwg.mxu0
        %645 = vrot.lane.b32.xlu0 %v556, 96
        %v646 = vpop.permute.xlu0 %645
        %v647 = vsel %vm570, %v646, 0
        %v649 = vsel %vm570, %v563, 0
        %651 = vmatprep.subr.mxu0 0.0
        %652 = vmatpush1.xpose.msra.mxu0 %v649
        %653 = vmatprep.subr.mxu0 0.0
        %654 = vmatpush1.xpose.msra.mxu0 0.0
        %655 = vmatprep.subr.mxu0 0.0
        %656 = vmatpush1.xpose.msra.mxu0 0.0
        %657 = vmatprep.subr.mxu0 0.0
        %658 = vmatpush1.xpose.msra.mxu0 0.0
        %659 = vmatprep.subr.mxu0 0.0
        %660 = vmatpush1.xpose.msra.mxu0 0.0
        %661 = vmatprep.subr.mxu0 0.0
        %662 = vmatpush1.xpose.msra.mxu0 0.0
        %663 = vmatprep.subr.mxu0 0.0
        %664 = vmatpush1.xpose.msra.mxu0 0.0
        %665 = vmatprep.subr.mxu0 0.0
        %666 = vmatpush1.xpose.msra.mxu0 0.0
        %667 = vmatprep.subr.mxu0 0.0
        %668 = vmatpush1.xpose.msra.mxu0 0.0
        %669 = vmatprep.subr.mxu0 0.0
        %670 = vmatpush1.xpose.msra.mxu0 0.0
        %671 = vmatprep.subr.mxu0 0.0
        %672 = vmatpush1.xpose.msra.mxu0 0.0
        %673 = vmatprep.subr.mxu0 0.0
        %674 = vmatpush1.xpose.msra.mxu0 0.0
        %675 = vmatprep.subr.mxu0 0.0
        %676 = vmatpush1.xpose.msra.mxu0 0.0
        %677 = vmatprep.subr.mxu0 0.0
        %678 = vmatpush1.xpose.msra.mxu0 0.0
        %679 = vmatprep.subr.mxu0 0.0
        %680 = vmatpush1.xpose.msra.mxu0 0.0
        %681 = vmatprep.subr.mxu0 0.0
        %682 = vmatpush1.xpose.msra.mxu0 0.0
        %683 = vmatprep.subr.mxu0 0.0
        %684 = vmatpush1.xpose.msra.mxu0 0.0
        %685 = vmatprep.subr.mxu0 0.0
        %686 = vmatpush1.xpose.msra.mxu0 0.0
        %687 = vmatprep.subr.mxu0 0.0
        %688 = vmatpush1.xpose.msra.mxu0 0.0
        %689 = vmatprep.subr.mxu0 0.0
        %690 = vmatpush1.xpose.msra.mxu0 0.0
        %691 = vmatprep.subr.mxu0 0.0
        %692 = vmatpush1.xpose.msra.mxu0 0.0
        %693 = vmatprep.subr.mxu0 0.0
        %694 = vmatpush1.xpose.msra.mxu0 0.0
        %695 = vmatprep.subr.mxu0 0.0
        %696 = vmatpush1.xpose.msra.mxu0 0.0
        %697 = vmatprep.subr.mxu0 0.0
        %698 = vmatpush1.xpose.msra.mxu0 0.0
        %699 = vmatprep.subr.mxu0 0.0
        %700 = vmatpush1.xpose.msra.mxu0 0.0
        %701 = vmatprep.subr.mxu0 0.0
        %702 = vmatpush1.xpose.msra.mxu0 0.0
        %703 = vmatprep.subr.mxu0 0.0
        %704 = vmatpush1.xpose.msra.mxu0 0.0
        %705 = vmatprep.subr.mxu0 0.0
        %706 = vmatpush1.xpose.msra.mxu0 0.0
        %707 = vmatprep.subr.mxu0 0.0
        %708 = vmatpush1.xpose.msra.mxu0 0.0
        %709 = vmatprep.subr.mxu0 0.0
        %710 = vmatpush1.xpose.msra.mxu0 0.0
        %711 = vmatprep.subr.mxu0 0.0
        %712 = vmatpush1.xpose.msra.mxu0 0.0
        %713 = vmatprep.subr.mxu0 0.0
        %714 = vmatpush1.xpose.msra.mxu0 0.0
        %715 = vmatprep.mubr.f32.mxu0 0.0
        %716 = vmatmul.mubr.f32.gmra.mrb[0].mxu0 %v647
        %v717 = vpop.f32.mrb[0].mxu0
        %v718 = vadd.f32 0.0, %v717
        %v719 = vpop.f32.mrb[0].mxu0
        %720 = vdwg.mxu0
        %721 = vrot.lane.b32.xlu0 %v558, 96
        %v722 = vpop.permute.xlu0 %721
        %v723 = vsel %vm570, %v722, 0
        %v725 = vsel %vm570, %v565, 0
        %727 = vmatprep.subr.mxu0 0.0
        %728 = vmatpush1.xpose.msra.mxu0 %v725
        %729 = vmatprep.subr.mxu0 0.0
        %730 = vmatpush1.xpose.msra.mxu0 0.0
        %731 = vmatprep.subr.mxu0 0.0
        %732 = vmatpush1.xpose.msra.mxu0 0.0
        %733 = vmatprep.subr.mxu0 0.0
        %734 = vmatpush1.xpose.msra.mxu0 0.0
        %735 = vmatprep.subr.mxu0 0.0
        %736 = vmatpush1.xpose.msra.mxu0 0.0
        %737 = vmatprep.subr.mxu0 0.0
        %738 = vmatpush1.xpose.msra.mxu0 0.0
        %739 = vmatprep.subr.mxu0 0.0
        %740 = vmatpush1.xpose.msra.mxu0 0.0
        %741 = vmatprep.subr.mxu0 0.0
        %742 = vmatpush1.xpose.msra.mxu0 0.0
        %743 = vmatprep.subr.mxu0 0.0
        %744 = vmatpush1.xpose.msra.mxu0 0.0
        %745 = vmatprep.subr.mxu0 0.0
        %746 = vmatpush1.xpose.msra.mxu0 0.0
        %747 = vmatprep.subr.mxu0 0.0
        %748 = vmatpush1.xpose.msra.mxu0 0.0
        %749 = vmatprep.subr.mxu0 0.0
        %750 = vmatpush1.xpose.msra.mxu0 0.0
        %751 = vmatprep.subr.mxu0 0.0
        %752 = vmatpush1.xpose.msra.mxu0 0.0
        %753 = vmatprep.subr.mxu0 0.0
        %754 = vmatpush1.xpose.msra.mxu0 0.0
        %755 = vmatprep.subr.mxu0 0.0
        %756 = vmatpush1.xpose.msra.mxu0 0.0
        %757 = vmatprep.subr.mxu0 0.0
        %758 = vmatpush1.xpose.msra.mxu0 0.0
        %759 = vmatprep.subr.mxu0 0.0
        %760 = vmatpush1.xpose.msra.mxu0 0.0
        %761 = vmatprep.subr.mxu0 0.0
        %762 = vmatpush1.xpose.msra.mxu0 0.0
        %763 = vmatprep.subr.mxu0 0.0
        %764 = vmatpush1.xpose.msra.mxu0 0.0
        %765 = vmatprep.subr.mxu0 0.0
        %766 = vmatpush1.xpose.msra.mxu0 0.0
        %767 = vmatprep.subr.mxu0 0.0
        %768 = vmatpush1.xpose.msra.mxu0 0.0
        %769 = vmatprep.subr.mxu0 0.0
        %770 = vmatpush1.xpose.msra.mxu0 0.0
        %771 = vmatprep.subr.mxu0 0.0
        %772 = vmatpush1.xpose.msra.mxu0 0.0
        %773 = vmatprep.subr.mxu0 0.0
        %774 = vmatpush1.xpose.msra.mxu0 0.0
        %775 = vmatprep.subr.mxu0 0.0
        %776 = vmatpush1.xpose.msra.mxu0 0.0
        %777 = vmatprep.subr.mxu0 0.0
        %778 = vmatpush1.xpose.msra.mxu0 0.0
        %779 = vmatprep.subr.mxu0 0.0
        %780 = vmatpush1.xpose.msra.mxu0 0.0
        %781 = vmatprep.subr.mxu0 0.0
        %782 = vmatpush1.xpose.msra.mxu0 0.0
        %783 = vmatprep.subr.mxu0 0.0
        %784 = vmatpush1.xpose.msra.mxu0 0.0
        %785 = vmatprep.subr.mxu0 0.0
        %786 = vmatpush1.xpose.msra.mxu0 0.0
        %787 = vmatprep.subr.mxu0 0.0
        %788 = vmatpush1.xpose.msra.mxu0 0.0
        %789 = vmatprep.subr.mxu0 0.0
        %790 = vmatpush1.xpose.msra.mxu0 0.0
        %791 = vmatprep.mubr.f32.mxu0 0.0
        %792 = vmatmul.mubr.f32.gmra.mrb[0].mxu0 %v723
        %v793 = vpop.f32.mrb[0].mxu0
        %v794 = vadd.f32 0.0, %v793
        %v795 = vpop.f32.mrb[0].mxu0
        %796 = vdwg.mxu0
        %797 = vrot.lane.b32.xlu0 %v560, 96
        %v798 = vpop.permute.xlu0 %797
        %v799 = vsel %vm570, %v798, 0
        %v801 = vsel %vm570, %v567, 0
        %803 = vmatprep.subr.mxu0 0.0
        %804 = vmatpush1.xpose.msra.mxu0 %v801
        %805 = vmatprep.subr.mxu0 0.0
        %806 = vmatpush1.xpose.msra.mxu0 0.0
        %807 = vmatprep.subr.mxu0 0.0
        %808 = vmatpush1.xpose.msra.mxu0 0.0
        %809 = vmatprep.subr.mxu0 0.0
        %810 = vmatpush1.xpose.msra.mxu0 0.0
        %811 = vmatprep.subr.mxu0 0.0
        %812 = vmatpush1.xpose.msra.mxu0 0.0
        %813 = vmatprep.subr.mxu0 0.0
        %814 = vmatpush1.xpose.msra.mxu0 0.0
        %815 = vmatprep.subr.mxu0 0.0
        %816 = vmatpush1.xpose.msra.mxu0 0.0
        %817 = vmatprep.subr.mxu0 0.0
        %818 = vmatpush1.xpose.msra.mxu0 0.0
        %819 = vmatprep.subr.mxu0 0.0
        %820 = vmatpush1.xpose.msra.mxu0 0.0
        %821 = vmatprep.subr.mxu0 0.0
        %822 = vmatpush1.xpose.msra.mxu0 0.0
        %823 = vmatprep.subr.mxu0 0.0
        %824 = vmatpush1.xpose.msra.mxu0 0.0
        %825 = vmatprep.subr.mxu0 0.0
        %826 = vmatpush1.xpose.msra.mxu0 0.0
        %827 = vmatprep.subr.mxu0 0.0
        %828 = vmatpush1.xpose.msra.mxu0 0.0
        %829 = vmatprep.subr.mxu0 0.0
        %830 = vmatpush1.xpose.msra.mxu0 0.0
        %831 = vmatprep.subr.mxu0 0.0
        %832 = vmatpush1.xpose.msra.mxu0 0.0
        %833 = vmatprep.subr.mxu0 0.0
        %834 = vmatpush1.xpose.msra.mxu0 0.0
        %835 = vmatprep.subr.mxu0 0.0
        %836 = vmatpush1.xpose.msra.mxu0 0.0
        %837 = vmatprep.subr.mxu0 0.0
        %838 = vmatpush1.xpose.msra.mxu0 0.0
        %839 = vmatprep.subr.mxu0 0.0
        %840 = vmatpush1.xpose.msra.mxu0 0.0
        %841 = vmatprep.subr.mxu0 0.0
        %842 = vmatpush1.xpose.msra.mxu0 0.0
        %843 = vmatprep.subr.mxu0 0.0
        %844 = vmatpush1.xpose.msra.mxu0 0.0
        %845 = vmatprep.subr.mxu0 0.0
        %846 = vmatpush1.xpose.msra.mxu0 0.0
        %847 = vmatprep.subr.mxu0 0.0
        %848 = vmatpush1.xpose.msra.mxu0 0.0
        %849 = vmatprep.subr.mxu0 0.0
        %850 = vmatpush1.xpose.msra.mxu0 0.0
        %851 = vmatprep.subr.mxu0 0.0
        %852 = vmatpush1.xpose.msra.mxu0 0.0
        %853 = vmatprep.subr.mxu0 0.0
        %854 = vmatpush1.xpose.msra.mxu0 0.0
        %855 = vmatprep.subr.mxu0 0.0
        %856 = vmatpush1.xpose.msra.mxu0 0.0
        %857 = vmatprep.subr.mxu0 0.0
        %858 = vmatpush1.xpose.msra.mxu0 0.0
        %859 = vmatprep.subr.mxu0 0.0
        %860 = vmatpush1.xpose.msra.mxu0 0.0
        %861 = vmatprep.subr.mxu0 0.0
        %862 = vmatpush1.xpose.msra.mxu0 0.0
        %863 = vmatprep.subr.mxu0 0.0
        %864 = vmatpush1.xpose.msra.mxu0 0.0
        %865 = vmatprep.subr.mxu0 0.0
        %866 = vmatpush1.xpose.msra.mxu0 0.0
        %867 = vmatprep.mubr.f32.mxu0 0.0
        %868 = vmatmul.mubr.f32.gmra.mrb[0].mxu0 %v799
        %v869 = vpop.f32.mrb[0].mxu0
        %v870 = vadd.f32 0.0, %v869
        %v871 = vpop.f32.mrb[0].mxu0
        %872 = vdwg.mxu0
        %v873 = vsel %vm570, %v642, -inf
        %874 = vmax.xlane.f32.xlu0 %v873
        %v875 = vpop.xlane.xlu0 %874
        %v876 = vsel %vm570, %v718, -inf
        %877 = vmax.xlane.f32.xlu0 %v876
        %v878 = vpop.xlane.xlu0 %877
        %v879 = vsel %vm570, %v794, -inf
        %880 = vmax.xlane.f32.xlu0 %v879
        %v881 = vpop.xlane.xlu0 %880
        %v882 = vsel %vm570, %v870, -inf
        %883 = vmax.xlane.f32.xlu0 %v882
        %v884 = vpop.xlane.xlu0 %883
        %v885 = vsub.f32 %v642, %v875
        %v886 = vsub.f32 %v718, %v878
        %v887 = vsub.f32 %v794, %v881
        %v888 = vsub.f32 %v870, %v884
        %v889 = vmul.f32 %v885, 1.442695
        %v890 = vpow.pop %v889
        %v891 = vmul.f32 %v886, 1.442695
        %v892 = vpow.pop %v891
        %v893 = vmul.f32 %v887, 1.442695
        %v894 = vpow.pop %v893
        %v895 = vmul.f32 %v888, 1.442695
        %v896 = vpow.pop %v895
        %v897 = vsel %vm570, %v890, 0.0
        %898 = vadd.xlane.f32.xlu0 %v897
        %v899 = vpop.xlane.xlu0 %898
        %v900 = vsel %vm570, %v892, 0.0
        %901 = vadd.xlane.f32.xlu0 %v900
        %v902 = vpop.xlane.xlu0 %901
        %v903 = vsel %vm570, %v894, 0.0
        %904 = vadd.xlane.f32.xlu0 %v903
        %v905 = vpop.xlane.xlu0 %904
        %v906 = vsel %vm570, %v896, 0.0
        %907 = vadd.xlane.f32.xlu0 %v906
        %v908 = vpop.xlane.xlu0 %907
        %v909 = vrcp.pop %v899
        %v910 = vrcp.pop %v902
        %v911 = vrcp.pop %v905
        %v912 = vrcp.pop %v908
        %v913 = vmul.f32 %v890, %v909
        %v914 = vmul.f32 %v892, %v910
        %v915 = vmul.f32 %v894, %v911
        %v916 = vmul.f32 %v896, %v912
        %917 = vrot.lane.b32.xlu0 %v551, 96
        %v918 = vpop.permute.xlu0 %917
        %v921 = vsel %vm570, %v913, 0
        %923 = vmatprep.subr.mxu0 0.0
        %924 = vmatpush1.msra.mxu0 %v918
        %925 = vmatprep.subr.mxu0 0.0
        %926 = vmatpush1.msra.mxu0 0.0
        %927 = vmatprep.subr.mxu0 0.0
        %928 = vmatpush1.msra.mxu0 0.0
        %929 = vmatprep.subr.mxu0 0.0
        %930 = vmatpush1.msra.mxu0 0.0
        %931 = vmatprep.subr.mxu0 0.0
        %932 = vmatpush1.msra.mxu0 0.0
        %933 = vmatprep.subr.mxu0 0.0
        %934 = vmatpush1.msra.mxu0 0.0
        %935 = vmatprep.subr.mxu0 0.0
        %936 = vmatpush1.msra.mxu0 0.0
        %937 = vmatprep.subr.mxu0 0.0
        %938 = vmatpush1.msra.mxu0 0.0
        %939 = vmatprep.subr.mxu0 0.0
        %940 = vmatpush1.msra.mxu0 0.0
        %941 = vmatprep.subr.mxu0 0.0
        %942 = vmatpush1.msra.mxu0 0.0
        %943 = vmatprep.subr.mxu0 0.0
        %944 = vmatpush1.msra.mxu0 0.0
        %945 = vmatprep.subr.mxu0 0.0
        %946 = vmatpush1.msra.mxu0 0.0
        %947 = vmatprep.subr.mxu0 0.0
        %948 = vmatpush1.msra.mxu0 0.0
        %949 = vmatprep.subr.mxu0 0.0
        %950 = vmatpush1.msra.mxu0 0.0
        %951 = vmatprep.subr.mxu0 0.0
        %952 = vmatpush1.msra.mxu0 0.0
        %953 = vmatprep.subr.mxu0 0.0
        %954 = vmatpush1.msra.mxu0 0.0
        %955 = vmatprep.subr.mxu0 0.0
        %956 = vmatpush1.msra.mxu0 0.0
        %957 = vmatprep.subr.mxu0 0.0
        %958 = vmatpush1.msra.mxu0 0.0
        %959 = vmatprep.subr.mxu0 0.0
        %960 = vmatpush1.msra.mxu0 0.0
        %961 = vmatprep.subr.mxu0 0.0
        %962 = vmatpush1.msra.mxu0 0.0
        %963 = vmatprep.subr.mxu0 0.0
        %964 = vmatpush1.msra.mxu0 0.0
        %965 = vmatprep.subr.mxu0 0.0
        %966 = vmatpush1.msra.mxu0 0.0
        %967 = vmatprep.subr.mxu0 0.0
        %968 = vmatpush1.msra.mxu0 0.0
        %969 = vmatprep.subr.mxu0 0.0
        %970 = vmatpush1.msra.mxu0 0.0
        %971 = vmatprep.subr.mxu0 0.0
        %972 = vmatpush1.msra.mxu0 0.0
        %973 = vmatprep.subr.mxu0 0.0
        %974 = vmatpush1.msra.mxu0 0.0
        %975 = vmatprep.subr.mxu0 0.0
        %976 = vmatpush1.msra.mxu0 0.0
        %977 = vmatprep.subr.mxu0 0.0
        %978 = vmatpush1.msra.mxu0 0.0
        %979 = vmatprep.subr.mxu0 0.0
        %980 = vmatpush1.msra.mxu0 0.0
        %981 = vmatprep.subr.mxu0 0.0
        %982 = vmatpush1.msra.mxu0 0.0
        %983 = vmatprep.subr.mxu0 0.0
        %984 = vmatpush1.msra.mxu0 0.0
        %985 = vmatprep.subr.mxu0 0.0
        %986 = vmatpush1.msra.mxu0 0.0
        %987 = vmatprep.mubr.f32.mxu0 0.0
        %988 = vmatmul.mubr.f32.gmra.mrb[0].mxu0 %v921
        %v989 = vpop.f32.mrb[0].mxu0
        %v990 = vadd.f32 0.0, %v989
        %v991 = vpop.f32.mrb[0].mxu0
        %992 = vdwg.mxu0
        %993 = vrot.lane.b32.xlu0 %v563, 96
        %v994 = vpop.permute.xlu0 %993
        %v997 = vsel %vm570, %v914, 0
        %999 = vmatprep.subr.mxu0 0.0
        %1000 = vmatpush1.msra.mxu0 %v994
        %1001 = vmatprep.subr.mxu0 0.0
        %1002 = vmatpush1.msra.mxu0 0.0
        %1003 = vmatprep.subr.mxu0 0.0
        %1004 = vmatpush1.msra.mxu0 0.0
        %1005 = vmatprep.subr.mxu0 0.0
        %1006 = vmatpush1.msra.mxu0 0.0
        %1007 = vmatprep.subr.mxu0 0.0
        %1008 = vmatpush1.msra.mxu0 0.0
        %1009 = vmatprep.subr.mxu0 0.0
        %1010 = vmatpush1.msra.mxu0 0.0
        %1011 = vmatprep.subr.mxu0 0.0
        %1012 = vmatpush1.msra.mxu0 0.0
        %1013 = vmatprep.subr.mxu0 0.0
        %1014 = vmatpush1.msra.mxu0 0.0
        %1015 = vmatprep.subr.mxu0 0.0
        %1016 = vmatpush1.msra.mxu0 0.0
        %1017 = vmatprep.subr.mxu0 0.0
        %1018 = vmatpush1.msra.mxu0 0.0
        %1019 = vmatprep.subr.mxu0 0.0
        %1020 = vmatpush1.msra.mxu0 0.0
        %1021 = vmatprep.subr.mxu0 0.0
        %1022 = vmatpush1.msra.mxu0 0.0
        %1023 = vmatprep.subr.mxu0 0.0
        %1024 = vmatpush1.msra.mxu0 0.0
        %1025 = vmatprep.subr.mxu0 0.0
        %1026 = vmatpush1.msra.mxu0 0.0
        %1027 = vmatprep.subr.mxu0 0.0
        %1028 = vmatpush1.msra.mxu0 0.0
        %1029 = vmatprep.subr.mxu0 0.0
        %1030 = vmatpush1.msra.mxu0 0.0
        %1031 = vmatprep.subr.mxu0 0.0
        %1032 = vmatpush1.msra.mxu0 0.0
        %1033 = vmatprep.subr.mxu0 0.0
        %1034 = vmatpush1.msra.mxu0 0.0
        %1035 = vmatprep.subr.mxu0 0.0
        %1036 = vmatpush1.msra.mxu0 0.0
        %1037 = vmatprep.subr.mxu0 0.0
        %1038 = vmatpush1.msra.mxu0 0.0
        %1039 = vmatprep.subr.mxu0 0.0
        %1040 = vmatpush1.msra.mxu0 0.0
        %1041 = vmatprep.subr.mxu0 0.0
        %1042 = vmatpush1.msra.mxu0 0.0
        %1043 = vmatprep.subr.mxu0 0.0
        %1044 = vmatpush1.msra.mxu0 0.0
        %1045 = vmatprep.subr.mxu0 0.0
        %1046 = vmatpush1.msra.mxu0 0.0
        %1047 = vmatprep.subr.mxu0 0.0
        %1048 = vmatpush1.msra.mxu0 0.0
        %1049 = vmatprep.subr.mxu0 0.0
        %1050 = vmatpush1.msra.mxu0 0.0
        %1051 = vmatprep.subr.mxu0 0.0
        %1052 = vmatpush1.msra.mxu0 0.0
        %1053 = vmatprep.subr.mxu0 0.0
        %1054 = vmatpush1.msra.mxu0 0.0
        %1055 = vmatprep.subr.mxu0 0.0
        %1056 = vmatpush1.msra.mxu0 0.0
        %1057 = vmatprep.subr.mxu0 0.0
        %1058 = vmatpush1.msra.mxu0 0.0
        %1059 = vmatprep.subr.mxu0 0.0
        %1060 = vmatpush1.msra.mxu0 0.0
        %1061 = vmatprep.subr.mxu0 0.0
        %1062 = vmatpush1.msra.mxu0 0.0
        %1063 = vmatprep.mubr.f32.mxu0 0.0
        %1064 = vmatmul.mubr.f32.gmra.mrb[0].mxu0 %v997
        %v1065 = vpop.f32.mrb[0].mxu0
        %v1066 = vadd.f32 0.0, %v1065
        %v1067 = vpop.f32.mrb[0].mxu0
        %1068 = vdwg.mxu0
        %1069 = vrot.lane.b32.xlu0 %v565, 96
        %v1070 = vpop.permute.xlu0 %1069
        %v1073 = vsel %vm570, %v915, 0
        %1075 = vmatprep.subr.mxu0 0.0
        %1076 = vmatpush1.msra.mxu0 %v1070
        %1077 = vmatprep.subr.mxu0 0.0
        %1078 = vmatpush1.msra.mxu0 0.0
        %1079 = vmatprep.subr.mxu0 0.0
        %1080 = vmatpush1.msra.mxu0 0.0
        %1081 = vmatprep.subr.mxu0 0.0
        %1082 = vmatpush1.msra.mxu0 0.0
        %1083 = vmatprep.subr.mxu0 0.0
        %1084 = vmatpush1.msra.mxu0 0.0
        %1085 = vmatprep.subr.mxu0 0.0
        %1086 = vmatpush1.msra.mxu0 0.0
        %1087 = vmatprep.subr.mxu0 0.0
        %1088 = vmatpush1.msra.mxu0 0.0
        %1089 = vmatprep.subr.mxu0 0.0
        %1090 = vmatpush1.msra.mxu0 0.0
        %1091 = vmatprep.subr.mxu0 0.0
        %1092 = vmatpush1.msra.mxu0 0.0
        %1093 = vmatprep.subr.mxu0 0.0
        %1094 = vmatpush1.msra.mxu0 0.0
        %1095 = vmatprep.subr.mxu0 0.0
        %1096 = vmatpush1.msra.mxu0 0.0
        %1097 = vmatprep.subr.mxu0 0.0
        %1098 = vmatpush1.msra.mxu0 0.0
        %1099 = vmatprep.subr.mxu0 0.0
        %1100 = vmatpush1.msra.mxu0 0.0
        %1101 = vmatprep.subr.mxu0 0.0
        %1102 = vmatpush1.msra.mxu0 0.0
        %1103 = vmatprep.subr.mxu0 0.0
        %1104 = vmatpush1.msra.mxu0 0.0
        %1105 = vmatprep.subr.mxu0 0.0
        %1106 = vmatpush1.msra.mxu0 0.0
        %1107 = vmatprep.subr.mxu0 0.0
        %1108 = vmatpush1.msra.mxu0 0.0
        %1109 = vmatprep.subr.mxu0 0.0
        %1110 = vmatpush1.msra.mxu0 0.0
        %1111 = vmatprep.subr.mxu0 0.0
        %1112 = vmatpush1.msra.mxu0 0.0
        %1113 = vmatprep.subr.mxu0 0.0
        %1114 = vmatpush1.msra.mxu0 0.0
        %1115 = vmatprep.subr.mxu0 0.0
        %1116 = vmatpush1.msra.mxu0 0.0
        %1117 = vmatprep.subr.mxu0 0.0
        %1118 = vmatpush1.msra.mxu0 0.0
        %1119 = vmatprep.subr.mxu0 0.0
        %1120 = vmatpush1.msra.mxu0 0.0
        %1121 = vmatprep.subr.mxu0 0.0
        %1122 = vmatpush1.msra.mxu0 0.0
        %1123 = vmatprep.subr.mxu0 0.0
        %1124 = vmatpush1.msra.mxu0 0.0
        %1125 = vmatprep.subr.mxu0 0.0
        %1126 = vmatpush1.msra.mxu0 0.0
        %1127 = vmatprep.subr.mxu0 0.0
        %1128 = vmatpush1.msra.mxu0 0.0
        %1129 = vmatprep.subr.mxu0 0.0
        %1130 = vmatpush1.msra.mxu0 0.0
        %1131 = vmatprep.subr.mxu0 0.0
        %1132 = vmatpush1.msra.mxu0 0.0
        %1133 = vmatprep.subr.mxu0 0.0
        %1134 = vmatpush1.msra.mxu0 0.0
        %1135 = vmatprep.subr.mxu0 0.0
        %1136 = vmatpush1.msra.mxu0 0.0
        %1137 = vmatprep.subr.mxu0 0.0
        %1138 = vmatpush1.msra.mxu0 0.0
        %1139 = vmatprep.mubr.f32.mxu0 0.0
        %1140 = vmatmul.mubr.f32.gmra.mrb[0].mxu0 %v1073
        %v1141 = vpop.f32.mrb[0].mxu0
        %v1142 = vadd.f32 0.0, %v1141
        %v1143 = vpop.f32.mrb[0].mxu0
        %1144 = vdwg.mxu0
        %1145 = vrot.lane.b32.xlu0 %v567, 96
        %v1146 = vpop.permute.xlu0 %1145
        %v1149 = vsel %vm570, %v916, 0
        %1151 = vmatprep.subr.mxu0 0.0
        %1152 = vmatpush1.msra.mxu0 %v1146
        %1153 = vmatprep.subr.mxu0 0.0
        %1154 = vmatpush1.msra.mxu0 0.0
        %1155 = vmatprep.subr.mxu0 0.0
        %1156 = vmatpush1.msra.mxu0 0.0
        %1157 = vmatprep.subr.mxu0 0.0
        %1158 = vmatpush1.msra.mxu0 0.0
        %1159 = vmatprep.subr.mxu0 0.0
        %1160 = vmatpush1.msra.mxu0 0.0
        %1161 = vmatprep.subr.mxu0 0.0
        %1162 = vmatpush1.msra.mxu0 0.0
        %1163 = vmatprep.subr.mxu0 0.0
        %1164 = vmatpush1.msra.mxu0 0.0
        %1165 = vmatprep.subr.mxu0 0.0
        %1166 = vmatpush1.msra.mxu0 0.0
        %1167 = vmatprep.subr.mxu0 0.0
        %1168 = vmatpush1.msra.mxu0 0.0
        %1169 = vmatprep.subr.mxu0 0.0
        %1170 = vmatpush1.msra.mxu0 0.0
        %1171 = vmatprep.subr.mxu0 0.0
        %1172 = vmatpush1.msra.mxu0 0.0
        %1173 = vmatprep.subr.mxu0 0.0
        %1174 = vmatpush1.msra.mxu0 0.0
        %1175 = vmatprep.subr.mxu0 0.0
        %1176 = vmatpush1.msra.mxu0 0.0
        %1177 = vmatprep.subr.mxu0 0.0
        %1178 = vmatpush1.msra.mxu0 0.0
        %1179 = vmatprep.subr.mxu0 0.0
        %1180 = vmatpush1.msra.mxu0 0.0
        %1181 = vmatprep.subr.mxu0 0.0
        %1182 = vmatpush1.msra.mxu0 0.0
        %1183 = vmatprep.subr.mxu0 0.0
        %1184 = vmatpush1.msra.mxu0 0.0
        %1185 = vmatprep.subr.mxu0 0.0
        %1186 = vmatpush1.msra.mxu0 0.0
        %1187 = vmatprep.subr.mxu0 0.0
        %1188 = vmatpush1.msra.mxu0 0.0
        %1189 = vmatprep.subr.mxu0 0.0
        %1190 = vmatpush1.msra.mxu0 0.0
        %1191 = vmatprep.subr.mxu0 0.0
        %1192 = vmatpush1.msra.mxu0 0.0
        %1193 = vmatprep.subr.mxu0 0.0
        %1194 = vmatpush1.msra.mxu0 0.0
        %1195 = vmatprep.subr.mxu0 0.0
        %1196 = vmatpush1.msra.mxu0 0.0
        %1197 = vmatprep.subr.mxu0 0.0
        %1198 = vmatpush1.msra.mxu0 0.0
        %1199 = vmatprep.subr.mxu0 0.0
        %1200 = vmatpush1.msra.mxu0 0.0
        %1201 = vmatprep.subr.mxu0 0.0
        %1202 = vmatpush1.msra.mxu0 0.0
        %1203 = vmatprep.subr.mxu0 0.0
        %1204 = vmatpush1.msra.mxu0 0.0
        %1205 = vmatprep.subr.mxu0 0.0
        %1206 = vmatpush1.msra.mxu0 0.0
        %1207 = vmatprep.subr.mxu0 0.0
        %1208 = vmatpush1.msra.mxu0 0.0
        %1209 = vmatprep.subr.mxu0 0.0
        %1210 = vmatpush1.msra.mxu0 0.0
        %1211 = vmatprep.subr.mxu0 0.0
        %1212 = vmatpush1.msra.mxu0 0.0
        %1213 = vmatprep.subr.mxu0 0.0
        %1214 = vmatpush1.msra.mxu0 0.0
        %1215 = vmatprep.mubr.f32.mxu0 0.0
        %1216 = vmatmul.mubr.f32.gmra.mrb[0].mxu0 %v1149
        %v1217 = vpop.f32.mrb[0].mxu0
        %v1218 = vadd.f32 0.0, %v1217
        %v1219 = vpop.f32.mrb[0].mxu0
        %1220 = vdwg.mxu0
        %v1221 = vadd.f32 %v913, %v914
        %v1222 = vadd.f32 %v1221, %v915
        %v1223 = vadd.f32 %v1222, %v916
        %v1224 = vmul.f32 %v1223, 0.25
        %1226 = vrot.lane.b32.xlu0 %v1066, 8
        %v1227 = vpop.permute.xlu0 %1226
        %1230 = vrot.lane.b32.xlu0 %v1142, 16
        %v1231 = vpop.permute.xlu0 %1230
        %1234 = vrot.lane.b32.xlu0 %v1218, 24
        %v1235 = vpop.permute.xlu0 %1234
        %v1237 = vsel %vm570, %v990, %v1227
        %vm1238 = vcmask 130048
        %v1239 = vsel %vm1238, %v1237, %v1231
        %vm1240 = vcmask 195584
        %v1241 = vsel %vm1240, %v1239, %v1235
        %v1242 = vlaneseq
        %v1243 = vshrl.u32 %v1242, 7
        %v1244 = vsub.s32 0, %v1243
        %v1245 = vrot.slane %v398, %v1244
        %v1247 = vsel %vm403, %v1241, 0
        %1249 = vmatprep.subr.mxu0 0.0
        %1250 = vmatpush1.msra.mxu0 %v382
        %1251 = vmatprep.subr.mxu0 0.0
        %1252 = vmatpush1.msra.mxu0 %v383
        %1253 = vmatprep.subr.mxu0 0.0
        %1254 = vmatpush1.msra.mxu0 %v384
        %1255 = vmatprep.subr.mxu0 0.0
        %1256 = vmatpush1.msra.mxu0 %v385
        %1257 = vmatprep.subr.mxu0 0.0
        %1258 = vmatpush1.msra.mxu0 0.0
        %1259 = vmatprep.subr.mxu0 0.0
        %1260 = vmatpush1.msra.mxu0 0.0
        %1261 = vmatprep.subr.mxu0 0.0
        %1262 = vmatpush1.msra.mxu0 0.0
        %1263 = vmatprep.subr.mxu0 0.0
        %1264 = vmatpush1.msra.mxu0 0.0
        %1265 = vmatprep.subr.mxu0 0.0
        %1266 = vmatpush1.msra.mxu0 0.0
        %1267 = vmatprep.subr.mxu0 0.0
        %1268 = vmatpush1.msra.mxu0 0.0
        %1269 = vmatprep.subr.mxu0 0.0
        %1270 = vmatpush1.msra.mxu0 0.0
        %1271 = vmatprep.subr.mxu0 0.0
        %1272 = vmatpush1.msra.mxu0 0.0
        %1273 = vmatprep.subr.mxu0 0.0
        %1274 = vmatpush1.msra.mxu0 0.0
        %1275 = vmatprep.subr.mxu0 0.0
        %1276 = vmatpush1.msra.mxu0 0.0
        %1277 = vmatprep.subr.mxu0 0.0
        %1278 = vmatpush1.msra.mxu0 0.0
        %1279 = vmatprep.subr.mxu0 0.0
        %1280 = vmatpush1.msra.mxu0 0.0
        %1281 = vmatprep.subr.mxu0 0.0
        %1282 = vmatpush1.msra.mxu0 0.0
        %1283 = vmatprep.subr.mxu0 0.0
        %1284 = vmatpush1.msra.mxu0 0.0
        %1285 = vmatprep.subr.mxu0 0.0
        %1286 = vmatpush1.msra.mxu0 0.0
        %1287 = vmatprep.subr.mxu0 0.0
        %1288 = vmatpush1.msra.mxu0 0.0
        %1289 = vmatprep.subr.mxu0 0.0
        %1290 = vmatpush1.msra.mxu0 0.0
        %1291 = vmatprep.subr.mxu0 0.0
        %1292 = vmatpush1.msra.mxu0 0.0
        %1293 = vmatprep.subr.mxu0 0.0
        %1294 = vmatpush1.msra.mxu0 0.0
        %1295 = vmatprep.subr.mxu0 0.0
        %1296 = vmatpush1.msra.mxu0 0.0
        %1297 = vmatprep.subr.mxu0 0.0
        %1298 = vmatpush1.msra.mxu0 0.0
        %1299 = vmatprep.subr.mxu0 0.0
        %1300 = vmatpush1.msra.mxu0 0.0
        %1301 = vmatprep.subr.mxu0 0.0
        %1302 = vmatpush1.msra.mxu0 0.0
        %1303 = vmatprep.subr.mxu0 0.0
        %1304 = vmatpush1.msra.mxu0 0.0
        %1305 = vmatprep.subr.mxu0 0.0
        %1306 = vmatpush1.msra.mxu0 0.0
        %1307 = vmatprep.subr.mxu0 0.0
        %1308 = vmatpush1.msra.mxu0 0.0
        %1309 = vmatprep.subr.mxu0 0.0
        %1310 = vmatpush1.msra.mxu0 0.0
        %1311 = vmatprep.subr.mxu0 0.0
        %1312 = vmatpush1.msra.mxu0 0.0
        %1313 = vmatprep.mubr.f32.mxu0 0.0
        %1314 = vmatmul.mubr.f32.gmra.mrb[0].mxu0 %v1247
        %v1315 = vpop.f32.mrb[0].mxu0
        %v1316 = vadd.f32 %v1245, %v1315
        %v1317 = vpop.f32.mrb[0].mxu0
        %1318 = vdwg.mxu0
        %v1319 = vadd.f32 %v474, %v1316
        %v1320 = vsel %vm403, %v1319, 0.0
        %1321 = vadd.xlane.f32.xlu0 %v1320
        %v1322 = vpop.xlane.xlu0 %1321
        %v1323 = vrcp.pop 32.0
        %v1324 = vmul.f32 %v1322, %v1323
        %v1325 = vsub.f32 %v1319, %v1324
        %v1326 = vmul.f32 %v1325, %v1325
        %v1327 = vsel %vm403, %v1326, 0.0
        %1328 = vadd.xlane.f32.xlu0 %v1327
        %v1329 = vpop.xlane.xlu0 %1328
        %v1330 = vmul.f32 %v1329, %v1323
        %v1331 = vadd.f32 %v1330, 1e-05
        %v1332 = vrsqrt.pop %v1331
        %v1333 = vmul.f32 %v1325, %v1332
        %v1334 = vlaneseq
        %v1335 = vshrl.u32 %v1334, 7
        %v1336 = vsub.s32 1, %v1335
        %v1337 = vrot.slane %v398, %v1336
        %v1338 = vmul.f32 %v1333, %v1337
        %v1339 = vlaneseq
        %v1340 = vshrl.u32 %v1339, 7
        %v1341 = vsub.s32 2, %v1340
        %v1342 = vrot.slane %v398, %v1341
        %v1343 = vadd.f32 %v1338, %v1342
        %v1344 = vlaneseq
        %v1345 = vshrl.u32 %v1344, 7
        %v1346 = vsub.s32 3, %v1345
        %v1347 = vrot.slane %v398, %v1346
        %v1349 = vsel %vm403, %v1343, 0
        %1351 = vmatprep.subr.mxu0 0.0
        %1352 = vmatpush1.msra.mxu0 %v387
        %1353 = vmatprep.subr.mxu0 0.0
        %1354 = vmatpush1.msra.mxu0 %v388
        %1355 = vmatprep.subr.mxu0 0.0
        %1356 = vmatpush1.msra.mxu0 %v389
        %1357 = vmatprep.subr.mxu0 0.0
        %1358 = vmatpush1.msra.mxu0 %v390
        %1359 = vmatprep.subr.mxu0 0.0
        %1360 = vmatpush1.msra.mxu0 0.0
        %1361 = vmatprep.subr.mxu0 0.0
        %1362 = vmatpush1.msra.mxu0 0.0
        %1363 = vmatprep.subr.mxu0 0.0
        %1364 = vmatpush1.msra.mxu0 0.0
        %1365 = vmatprep.subr.mxu0 0.0
        %1366 = vmatpush1.msra.mxu0 0.0
        %1367 = vmatprep.subr.mxu0 0.0
        %1368 = vmatpush1.msra.mxu0 0.0
        %1369 = vmatprep.subr.mxu0 0.0
        %1370 = vmatpush1.msra.mxu0 0.0
        %1371 = vmatprep.subr.mxu0 0.0
        %1372 = vmatpush1.msra.mxu0 0.0
        %1373 = vmatprep.subr.mxu0 0.0
        %1374 = vmatpush1.msra.mxu0 0.0
        %1375 = vmatprep.subr.mxu0 0.0
        %1376 = vmatpush1.msra.mxu0 0.0
        %1377 = vmatprep.subr.mxu0 0.0
        %1378 = vmatpush1.msra.mxu0 0.0
        %1379 = vmatprep.subr.mxu0 0.0
        %1380 = vmatpush1.msra.mxu0 0.0
        %1381 = vmatprep.subr.mxu0 0.0
        %1382 = vmatpush1.msra.mxu0 0.0
        %1383 = vmatprep.subr.mxu0 0.0
        %1384 = vmatpush1.msra.mxu0 0.0
        %1385 = vmatprep.subr.mxu0 0.0
        %1386 = vmatpush1.msra.mxu0 0.0
        %1387 = vmatprep.subr.mxu0 0.0
        %1388 = vmatpush1.msra.mxu0 0.0
        %1389 = vmatprep.subr.mxu0 0.0
        %1390 = vmatpush1.msra.mxu0 0.0
        %1391 = vmatprep.subr.mxu0 0.0
        %1392 = vmatpush1.msra.mxu0 0.0
        %1393 = vmatprep.subr.mxu0 0.0
        %1394 = vmatpush1.msra.mxu0 0.0
        %1395 = vmatprep.subr.mxu0 0.0
        %1396 = vmatpush1.msra.mxu0 0.0
        %1397 = vmatprep.subr.mxu0 0.0
        %1398 = vmatpush1.msra.mxu0 0.0
        %1399 = vmatprep.subr.mxu0 0.0
        %1400 = vmatpush1.msra.mxu0 0.0
        %1401 = vmatprep.subr.mxu0 0.0
        %1402 = vmatpush1.msra.mxu0 0.0
        %1403 = vmatprep.subr.mxu0 0.0
        %1404 = vmatpush1.msra.mxu0 0.0
        %1405 = vmatprep.subr.mxu0 0.0
        %1406 = vmatpush1.msra.mxu0 0.0
        %1407 = vmatprep.subr.mxu0 0.0
        %1408 = vmatpush1.msra.mxu0 0.0
        %1409 = vmatprep.subr.mxu0 0.0
        %1410 = vmatpush1.msra.mxu0 0.0
        %1411 = vmatprep.subr.mxu0 0.0
        %1412 = vmatpush1.msra.mxu0 0.0
        %1413 = vmatprep.subr.mxu0 0.0
        %1414 = vmatpush1.msra.mxu0 0.0
        %1415 = vmatprep.mubr.f32.mxu0 0.0
        %1416 = vmatmul.mubr.f32.gmra.mrb[0].mxu0 %v1349
        %v1417 = vpop.f32.mrb[0].mxu0
        %v1418 = vadd.f32 %v1347, %v1417
        %v1419 = vpop.f32.mrb[0].mxu0
        %1420 = vdwg.mxu0
        %v1421 = vmax.f32 %v1418, 0.0
        %v1422 = vlaneseq
        %v1423 = vshrl.u32 %v1422, 7
        %v1424 = vsub.s32 4, %v1423
        %v1425 = vrot.slane %v398, %v1424
        %v1427 = vsel %vm403, %v1421, 0
        %1429 = vmatprep.subr.mxu0 0.0
        %1430 = vmatpush1.msra.mxu0 %v392
        %1431 = vmatprep.subr.mxu0 0.0
        %1432 = vmatpush1.msra.mxu0 %v393
        %1433 = vmatprep.subr.mxu0 0.0
        %1434 = vmatpush1.msra.mxu0 %v394
        %1435 = vmatprep.subr.mxu0 0.0
        %1436 = vmatpush1.msra.mxu0 %v395
        %1437 = vmatprep.subr.mxu0 0.0
        %1438 = vmatpush1.msra.mxu0 0.0
        %1439 = vmatprep.subr.mxu0 0.0
        %1440 = vmatpush1.msra.mxu0 0.0
        %1441 = vmatprep.subr.mxu0 0.0
        %1442 = vmatpush1.msra.mxu0 0.0
        %1443 = vmatprep.subr.mxu0 0.0
        %1444 = vmatpush1.msra.mxu0 0.0
        %1445 = vmatprep.subr.mxu0 0.0
        %1446 = vmatpush1.msra.mxu0 0.0
        %1447 = vmatprep.subr.mxu0 0.0
        %1448 = vmatpush1.msra.mxu0 0.0
        %1449 = vmatprep.subr.mxu0 0.0
        %1450 = vmatpush1.msra.mxu0 0.0
        %1451 = vmatprep.subr.mxu0 0.0
        %1452 = vmatpush1.msra.mxu0 0.0
        %1453 = vmatprep.subr.mxu0 0.0
        %1454 = vmatpush1.msra.mxu0 0.0
        %1455 = vmatprep.subr.mxu0 0.0
        %1456 = vmatpush1.msra.mxu0 0.0
        %1457 = vmatprep.subr.mxu0 0.0
        %1458 = vmatpush1.msra.mxu0 0.0
        %1459 = vmatprep.subr.mxu0 0.0
        %1460 = vmatpush1.msra.mxu0 0.0
        %1461 = vmatprep.subr.mxu0 0.0
        %1462 = vmatpush1.msra.mxu0 0.0
        %1463 = vmatprep.subr.mxu0 0.0
        %1464 = vmatpush1.msra.mxu0 0.0
        %1465 = vmatprep.subr.mxu0 0.0
        %1466 = vmatpush1.msra.mxu0 0.0
        %1467 = vmatprep.subr.mxu0 0.0
        %1468 = vmatpush1.msra.mxu0 0.0
        %1469 = vmatprep.subr.mxu0 0.0
        %1470 = vmatpush1.msra.mxu0 0.0
        %1471 = vmatprep.subr.mxu0 0.0
        %1472 = vmatpush1.msra.mxu0 0.0
        %1473 = vmatprep.subr.mxu0 0.0
        %1474 = vmatpush1.msra.mxu0 0.0
        %1475 = vmatprep.subr.mxu0 0.0
        %1476 = vmatpush1.msra.mxu0 0.0
        %1477 = vmatprep.subr.mxu0 0.0
        %1478 = vmatpush1.msra.mxu0 0.0
        %1479 = vmatprep.subr.mxu0 0.0
        %1480 = vmatpush1.msra.mxu0 0.0
        %1481 = vmatprep.subr.mxu0 0.0
        %1482 = vmatpush1.msra.mxu0 0.0
        %1483 = vmatprep.subr.mxu0 0.0
        %1484 = vmatpush1.msra.mxu0 0.0
        %1485 = vmatprep.subr.mxu0 0.0
        %1486 = vmatpush1.msra.mxu0 0.0
        %1487 = vmatprep.subr.mxu0 0.0
        %1488 = vmatpush1.msra.mxu0 0.0
        %1489 = vmatprep.subr.mxu0 0.0
        %1490 = vmatpush1.msra.mxu0 0.0
        %1491 = vmatprep.subr.mxu0 0.0
        %1492 = vmatpush1.msra.mxu0 0.0
        %1493 = vmatprep.mubr.f32.mxu0 0.0
        %1494 = vmatmul.mubr.f32.gmra.mrb[0].mxu0 %v1427
        %v1495 = vpop.f32.mrb[0].mxu0
        %v1496 = vadd.f32 %v1425, %v1495
        %v1497 = vpop.f32.mrb[0].mxu0
        %1498 = vdwg.mxu0
        %v1499 = vadd.f32 %v1343, %v1496
        %v1500 = vsel %vm403, %v1499, 0.0
        %1501 = vadd.xlane.f32.xlu0 %v1500
        %v1502 = vpop.xlane.xlu0 %1501
        %v1503 = vmul.f32 %v1502, %v1323
        %v1504 = vsub.f32 %v1499, %v1503
        %v1505 = vmul.f32 %v1504, %v1504
        %v1506 = vsel %vm403, %v1505, 0.0
        %1507 = vadd.xlane.f32.xlu0 %v1506
        %v1508 = vpop.xlane.xlu0 %1507
        %v1509 = vmul.f32 %v1508, %v1323
        %v1510 = vadd.f32 %v1509, 1e-05
        %v1511 = vrsqrt.pop %v1510
        %v1512 = vmul.f32 %v1504, %v1511
        %v1513 = vlaneseq
        %v1514 = vshrl.u32 %v1513, 7
        %v1515 = vsub.s32 5, %v1514
        %v1516 = vrot.slane %v398, %v1515
        %v1517 = vmul.f32 %v1512, %v1516
        %v1518 = vlaneseq
        %v1519 = vshrl.u32 %v1518, 7
        %v1520 = vsub.s32 6, %v1519
        %v1521 = vrot.slane %v398, %v1520
        %v1522 = vadd.f32 %v1517, %v1521
        %1523 = vst.msk [vmem:[%s363] sm:$0xff] %vm403, %v1522
        %1525 = vrot.lane.b32.xlu0 %v1316, 32
        %v1526 = vpop.permute.xlu0 %1525
        %vm1528 = vcmask 523520
        %1529 = vst.msk [vmem:[%s363] sm:$0xff] %vm1528, %v1526
        %1530 = vst.msk [vmem:[%s370] sm:$0xff] %vm570, %v1224
        %s1531 = sand.u32 %s176, 1
        %s1532 = scalar_lea.sflag [#allocation4], %s1531
        %s1533 = sand.u32 %s176, 1
        %s1534 = smul.addr %s1533, 8
        %s1535 = scalar_lea.vmem [#allocation10], %s1534
        %s1536 = sand.u32 %s202, 1
        %s1537 = scalar_lea.sflag [#allocation12], %s1536
        %s1538 = sand.u32 %s202, 1
        %s1539 = smul.addr %s1538, 8
        %s1540 = scalar_lea.vmem [#allocation11], %s1539
        // Predicated region
        $region61: #{tpu_custom_call.1} parent=43 // pred_check
          %p1541 = pneg %p186
        $region62: #{tpu_custom_call.1} parent=43 // pred_check_branch
          %1543 = sbr.rel (%p1541) target = $region64
        $region63: #{tpu_custom_call.1} parent=43 // pred_region
          %s1545 = ssub.s32 128, 128
          %1546 = vsyncadd %s1532, %s1545
          %s1547 = smul.addr %s32, 128
          %s1548 = scalar_lea.hbm %s6, %s1547
          %s1550 = sshll.u32 %s1535, 4
          %s1551 = int_to_ptr.vmem [resolvable:$true] %s1550
          %1553 = dma.vmem_to_hbm [thread:$0]  %s1551, 128, %s1548, %s1532
        $region64: #{tpu_custom_call.1} parent=43 // pred_fallthru
          _
        // Predicated region
        $region65: #{tpu_custom_call.1} parent=43 // pred_check
          %p1554 = pneg %p212
        $region66: #{tpu_custom_call.1} parent=43 // pred_check_branch
          %1556 = sbr.rel (%p1554) target = $region68
        $region67: #{tpu_custom_call.1} parent=43 // pred_region
          %s1558 = ssub.s32 128, 128
          %1559 = vsyncadd %s1537, %s1558
          %s1560 = smul.addr %s32, 128
          %s1561 = scalar_lea.hbm %s7, %s1560
          %s1563 = sshll.u32 %s1540, 4
          %s1564 = int_to_ptr.vmem [resolvable:$true] %s1563
          %1566 = dma.vmem_to_hbm [thread:$0]  %s1564, 128, %s1561, %s1537
        $region68: #{tpu_custom_call.1} parent=43 // pred_fallthru
          _
      $region44: #{tpu_custom_call.1} parent=5 // pred_fallthru
        _
      %p1567 = scmp.le.s32.totalorder 2, %s27
      // Predicated region
      $region69: #{tpu_custom_call.1} parent=5 // pred_check
        %p1568 = pneg %p1567
      $region70: #{tpu_custom_call.1} parent=5 // pred_check_branch
        %1570 = sbr.rel (%p1568) target = $region72
      $region71: #{tpu_custom_call.1} parent=5 // pred_region
        %s1571 = ssub.s32 %s27, 2
        // Predicated region
        $region73: #{tpu_custom_call.1} parent=71 // pred_check
          %p1572 = pneg %p192
        $region74: #{tpu_custom_call.1} parent=71 // pred_check_branch
          %1574 = sbr.rel (%p1572) target = $region76
        $region75: #{tpu_custom_call.1} parent=71 // pred_region
          %s1575 = sand.u32 %s177, 1
          %s1576 = scalar_lea.sflag [#allocation4], %s1575
          %s1577 = sand.u32 %s177, 1
          %s1578 = smul.addr %s1577, 8
          %s1579 = scalar_lea.vmem [#allocation10], %s1578
          %1580 = dma.done %s1576, 128
        $region76: #{tpu_custom_call.1} parent=71 // pred_fallthru
          _
        // Predicated region
        $region77: #{tpu_custom_call.1} parent=71 // pred_check
          %p1581 = pneg %p218
        $region78: #{tpu_custom_call.1} parent=71 // pred_check_branch
          %1583 = sbr.rel (%p1581) target = $region80
        $region79: #{tpu_custom_call.1} parent=71 // pred_region
          %s1584 = sand.u32 %s203, 1
          %s1585 = scalar_lea.sflag [#allocation12], %s1584
          %s1586 = sand.u32 %s203, 1
          %s1587 = smul.addr %s1586, 8
          %s1588 = scalar_lea.vmem [#allocation11], %s1587
          %1589 = dma.done %s1585, 128
        $region80: #{tpu_custom_call.1} parent=71 // pred_fallthru
          _
      $region72: #{tpu_custom_call.1} parent=5 // pred_fallthru
        _
    $region6: #{tpu_custom_call.1} parent=1 // loop_footer
      %s31 = sadd.s32 1, %s27
    $region7: #{tpu_custom_call.1} parent=1 // loop_footer_branch
      %26 = sbr.rel target = $region3
    $region8: #{tpu_custom_call.1} parent=1 // loop_exit
      _
    %1590 = vsyncpa [#allocation3], 1
    %s1591 = scalar_lea.sflag [#allocation3], 1
    %1592 = vsyncpa %s1591, 1
    %1593 = vsyncpa [#allocation6], 1
    %s1594 = scalar_lea.sflag [#allocation6], 1
    %1595 = vsyncpa %s1594, 1
    %1596 = vsyncpa [#allocation9], 1
    %1597 = vsyncpa [#allocation4], 1
    %s1598 = scalar_lea.sflag [#allocation4], 1
    %1599 = vsyncpa %s1598, 1
    %1600 = vsyncpa [#allocation12], 1
    %s1601 = scalar_lea.sflag [#allocation12], 1
    %1602 = vsyncpa %s1601, 1

</llo_original>
